<compile_context>
chip_gen: v5e
topology: v5e:2x2
jax: 0.10.0
libtpu: 0.0.40
codegen_flags: <defaults>
</compile_context>

<pallas_src>
import functools

import jax
import jax.numpy as jnp
from jax import lax
from jax.experimental import pallas as pl
from jax.experimental.pallas import tpu as pltpu


def _daegc_kernel(x_ref, adj_ref, w1_ref, an1_ref, w2_ref, an2_ref, mu_ref,
                  apred_ref, zq_ref, *, alpha, v):
    f32 = jnp.float32
    bf16 = jnp.bfloat16
    x = x_ref[...]
    adj = adj_ref[...]

    # "A @ B^T" contraction (contract last dim of both operands) -- avoids
    # explicit transposes inside the kernel.
    nt = (((1,), (1,)), ((), ()))

    # ---- get_M(adj): column-wise L1 normalize, M = (P + P @ P) / 2 ----------
    # adj is a non-negative 0/1 adjacency, so the L1 norm needs no abs().
    # TODO(synk): the original .cuda() device move is a no-op here.
    col_l1 = jnp.sum(adj, axis=0, keepdims=True)                          # (1, N)
    tran = adj * pl.reciprocal(jnp.maximum(col_l1, 1e-12))                # exact recip (reduced dim)
    tran_b = tran.astype(bf16)
    m_mat = (tran + jnp.dot(tran_b, tran_b, preferred_element_type=f32)) * 0.5

    # ---- GATLayer ------------------------------------------------------------
    def gat_layer(inp, w_aug, a_neigh_row):
        d = w_aug.shape[1] - 1
        # One MXU matmul yields both h and the folded self-attention column
        # (w_aug = [w | w @ a_self^T], precomputed in the wrapper).
        h_aug = jnp.dot(inp.astype(bf16), w_aug.astype(bf16),
                        preferred_element_type=f32)                       # (N, D+1)
        h = h_aug[:, :d]                                                  # (N, D)
        attn_self = h_aug[:, d:d + 1]                                     # (N, 1)
        # attn_neigh[j] = sum_k a_neigh[k] * h[j, k] computed directly as a
        # (1, N) row on the MXU (D*N MACs).
        attn_neigh = lax.dot_general(a_neigh_row, h, nt,
                                     preferred_element_type=f32)          # (1, N)
        attn = (attn_self + attn_neigh) * m_mat                           # (N, N)
        attn = jnp.where(attn > 0, attn, alpha * attn)                    # LeakyReLU
        # Reference-exact masking *before* the row max (-9e15 at non-edges):
        # the softmax shift is over edge logits only, non-edge exps underflow
        # to exact 0, and an empty row degrades to the same uniform row the
        # PyTorch -9e15 masking produces.
        logits = jnp.where(adj > 0, attn, -9e15)
        mx = jnp.max(logits, axis=1, keepdims=True)                       # (N, 1)
        e = jnp.exp(logits - mx)                                          # in [0, 1]
        denom = jnp.sum(e, axis=1, keepdims=True)                         # >= 1 (argmax term is exp(0))
        # Deferred softmax normalization: row scaling commutes with the
        # right-multiplication, so scale the (N, D) product instead of the
        # (N, N) weights.
        hp = jnp.dot(e.astype(bf16), h.astype(bf16),
                     preferred_element_type=f32)                          # (N, D)
        hp = hp * pl.reciprocal(denom, approx=True)
        # ELU; exp argument clamped so the discarded branch cannot overflow.
        return jnp.where(hp > 0, hp, jnp.exp(jnp.minimum(hp, 0.0)) - 1.0)

    h1 = gat_layer(x, w1_ref[...], an1_ref[...])
    h2 = gat_layer(h1, w2_ref[...], an2_ref[...])

    # ---- z = F.normalize(h, p=2, dim=1) --------------------------------------
    sumsq = jnp.sum(h2 * h2, axis=1, keepdims=True)                       # (N, 1)
    inv_nrm = lax.rsqrt(sumsq + 1e-24)                                    # EUP rsqrt
    z = h2 * inv_nrm

    # ---- A_pred = sigmoid(z @ z^T) --------------------------------------------
    z_b = z.astype(bf16)                                                  # unit-norm -> benign
    zzt = lax.dot_general(z_b, z_b, nt, preferred_element_type=f32)       # (N, N)
    # sigmoid(x) = 0.5*(tanh(x/2)+1): one EUP op per element instead of
    # exp + reciprocal on the (N,N) array (EUP is the closest-to-saturated unit).
    apred_ref[...] = 0.5 * (jnp.tanh(0.5 * zzt) + 1.0)
    # TODO(synk): emit A_pred as bf16 if the downstream reconstruction loss
    # tolerates it (halves the dominant HBM writeback / output VMEM buffer).

    # ---- q: Student-t soft assignment (get_Q) ---------------------------------
    mu = mu_ref[...]                                                      # (K, E)
    k_dim, e_dim = mu.shape
    # ||z_i||^2 from the already-computed squared norm; no extra (N, E) pass.
    z2 = sumsq * (inv_nrm * inv_nrm)                                      # (N, 1)
    mu2 = lax.dot_general(jnp.ones((1, e_dim), f32), mu * mu, nt,
                          preferred_element_type=f32)                     # (1, K)
    cross = lax.dot_general(z_b, mu.astype(bf16), nt,
                            preferred_element_type=f32)                   # (N, K)
    d2 = jnp.maximum(z2 + mu2 - 2.0 * cross, 0.0)                         # ||z_i - mu_j||^2
    q = pl.reciprocal(1.0 + d2 * (1.0 / v))                               # exact recip
    p = (v + 1.0) / 2.0
    if p != 1.0:                                                          # static branch
        q = q ** p
    q_sum = jnp.sum(q, axis=1, keepdims=True)
    q = q * pl.reciprocal(q_sum)                                          # exact: rows sum to 1

    # ---- lane-dense output slab [z | q | 0-pad] --------------------------------
    # z (N,E) and q (N,K) are far below 128 lanes; packing both into one
    # (N, 128)-padded slab makes the output spec / HBM writeback lane-dense.
    # One unmasked full-width zero store + two tiny slice stores.
    zq_ref[...] = jnp.zeros_like(zq_ref)
    zq_ref[:, 0:e_dim] = z
    zq_ref[:, e_dim:e_dim + k_dim] = q


def daegc_forward(x, adj, params, *, alpha=0.2, v=1.0):
    n, _ = x.shape
    k, e = params["cluster"].shape
    lanes = max(128, ((e + k + 127) // 128) * 128)

    # Fold the self-attention projection into the weight matmul:
    #   attn_self = (x @ w) @ a_self^T = x @ (w @ a_self^T)
    # so a single MXU matmul per layer yields both h and attn_self.
    w1_aug = jnp.concatenate(
        [params["w1"], params["w1"] @ params["a_self1"].T], axis=1)       # (F, H+1)
    w2_aug = jnp.concatenate(
        [params["w2"], params["w2"] @ params["a_self2"].T], axis=1)       # (H, E+1)

    # Fully fused, VMEM-resident design (no grid).  With ~8 live (N, N) f32
    # buffers this needs roughly 32*N^2 bytes: OK up to N ~ 1.4k on 128 MiB
    # parts (v5e/v6e) but only about N ~ 1k on v7x's 64 MiB VMEM.
    # TODO(synk): for larger N (and to use both v7x TensorCores), tile query
    # rows on a "parallel" grid axis (row block >= 512 per measured v6e
    # roofline) and sweep neighbor blocks with an online softmax on an
    # "arbitrary" axis, keeping tran / per-layer h resident while streaming
    # adj / A_pred row blocks.
    vmem_bytes = int(min(64 * 1024 * 1024, 64 * n * n + 8 * 1024 * 1024))

    kernel = functools.partial(_daegc_kernel, alpha=float(alpha), v=float(v))
    vmem = pl.BlockSpec(memory_space=pltpu.MemorySpace.VMEM)
    a_pred, zq = pl.pallas_call(
        kernel,
        out_shape=(
            jax.ShapeDtypeStruct((n, n), jnp.float32),       # A_pred
            jax.ShapeDtypeStruct((n, lanes), jnp.float32),   # [z | q | 0-pad]
        ),
        in_specs=[vmem] * 7,
        out_specs=(vmem, vmem),
        compiler_params=pltpu.CompilerParams(vmem_limit_bytes=vmem_bytes),
    )(x, adj, w1_aug, params["a_neigh1"], w2_aug, params["a_neigh2"],
      params["cluster"])
    return a_pred, zq[:, :e], zq[:, e:e + k]


def init_params(key, num_features, hidden_size, embedding_size, num_clusters):
    # Deterministic, xavier-style init (the attention vectors a_self / a_neigh,
    # originally (D, 1), are stored as row vectors (1, D) -- same semantics).
    def xavier_uniform(k, shape, gain=1.414):
        fan_in, fan_out = shape
        a = gain * (6.0 / (fan_in + fan_out)) ** 0.5
        return jax.random.uniform(k, shape, jnp.float32, -a, a)

    def xavier_normal(k, shape):
        fan_in, fan_out = shape
        std = (2.0 / (fan_in + fan_out)) ** 0.5
        return jax.random.normal(k, shape, jnp.float32) * std

    ks = jax.random.split(key, 7)
    return {
        "w1": xavier_uniform(ks[0], (num_features, hidden_size)),
        "a_self1": xavier_uniform(ks[1], (1, hidden_size)),
        "a_neigh1": xavier_uniform(ks[2], (1, hidden_size)),
        "w2": xavier_uniform(ks[3], (hidden_size, embedding_size)),
        "a_self2": xavier_uniform(ks[4], (1, embedding_size)),
        "a_neigh2": xavier_uniform(ks[5], (1, embedding_size)),
        "cluster": xavier_normal(ks[6], (num_clusters, embedding_size)),
    }


if __name__ == "__main__":
    N, NUM_FEATURES, HIDDEN, EMB, K = 128, 64, 32, 16, 8
    ALPHA, V = 0.2, 1.0

    key = jax.random.PRNGKey(0)
    kx, ka, kp = jax.random.split(key, 3)

    x = jax.random.normal(kx, (N, NUM_FEATURES), jnp.float32)
    a_rand = (jax.random.uniform(ka, (N, N)) < 0.2).astype(jnp.float32)
    adj = jnp.clip(a_rand + a_rand.T + jnp.eye(N, dtype=jnp.float32), 0.0, 1.0)

    params = init_params(kp, NUM_FEATURES, HIDDEN, EMB, K)

    a_pred, z, q = daegc_forward(x, adj, params, alpha=ALPHA, v=V)
    jax.block_until_ready((a_pred, z, q))

    assert a_pred.shape == (N, N) and z.shape == (N, EMB) and q.shape == (N, K)
    assert bool(jnp.all(jnp.isfinite(a_pred)))
    assert bool(jnp.all(jnp.isfinite(z)))
    assert bool(jnp.all(q >= 0.0))
    assert bool(jnp.allclose(jnp.sum(q, axis=1), 1.0, atol=1e-4))
    print("KERNEL_OK")
</pallas_src>

<mosaic_0001>
module attributes {stable_mosaic.version = 11 : i64} {
  func.func @_daegc_kernel(%arg0: memref<128x64xf32, #tpu.memory_space<vmem>>, %arg1: memref<128x128xf32, #tpu.memory_space<vmem>>, %arg2: memref<64x33xf32, #tpu.memory_space<vmem>>, %arg3: memref<1x32xf32, #tpu.memory_space<vmem>>, %arg4: memref<32x17xf32, #tpu.memory_space<vmem>>, %arg5: memref<1x16xf32, #tpu.memory_space<vmem>>, %arg6: memref<8x16xf32, #tpu.memory_space<vmem>>, %arg7: memref<128x128xf32, #tpu.memory_space<vmem>>, %arg8: memref<128x128xf32, #tpu.memory_space<vmem>>) attributes {dimension_semantics = [], scalar_prefetch = 0 : i64, scratch_operands = 0 : i64, tpu.core_type = #tpu.core_type<tc>} {
    %c0 = arith.constant 0 : index
    %c0_0 = arith.constant 0 : index
    %0 = vector.load %arg0[%c0, %c0_0] : memref<128x64xf32, #tpu.memory_space<vmem>>, vector<128x64xf32>
    %c0_1 = arith.constant 0 : index
    %c0_2 = arith.constant 0 : index
    %1 = vector.load %arg1[%c0_1, %c0_2] : memref<128x128xf32, #tpu.memory_space<vmem>>, vector<128x128xf32>
    %cst = arith.constant dense<0.000000e+00> : vector<128xf32>
    %2 = vector.multi_reduction <add>, %1, %cst [0] : vector<128x128xf32> to vector<128xf32>
    %3 = vector.shape_cast %2 : vector<128xf32> to vector<1x128xf32>
    %cst_3 = arith.constant 9.99999996E-13 : f32
    %4 = vector.broadcast %cst_3 : f32 to vector<1x128xf32>
    %5 = arith.maximumf %3, %4 : vector<1x128xf32>
    %6 = tpu.reciprocal %5 : vector<1x128xf32> -> vector<1x128xf32>
    %7 = vector.broadcast %6 : vector<1x128xf32> to vector<128x128xf32>
    %8 = arith.mulf %1, %7 : vector<128x128xf32>
    %9 = arith.truncf %8 : vector<128x128xf32> to vector<128x128xbf16>
    %cst_4 = arith.constant dense<0.000000e+00> : vector<128x128xf32>
    %10 = tpu.matmul %9, %9, %cst_4 {dimension_numbers = #tpu.dot_dimension_numbers<[1], [0], [0], [1], [0, 0, 1, 1], [], []>} : vector<128x128xbf16>, vector<128x128xbf16>, vector<128x128xf32> -> vector<128x128xf32>
    %11 = arith.addf %8, %10 : vector<128x128xf32>
    %cst_5 = arith.constant 5.000000e-01 : f32
    %12 = vector.broadcast %cst_5 : f32 to vector<128x128xf32>
    %13 = arith.mulf %11, %12 : vector<128x128xf32>
    %c0_6 = arith.constant 0 : index
    %c0_7 = arith.constant 0 : index
    %14 = vector.load %arg2[%c0_6, %c0_7] : memref<64x33xf32, #tpu.memory_space<vmem>>, vector<64x33xf32>
    %c0_8 = arith.constant 0 : index
    %c0_9 = arith.constant 0 : index
    %15 = vector.load %arg3[%c0_8, %c0_9] : memref<1x32xf32, #tpu.memory_space<vmem>>, vector<1x32xf32>
    %16 = arith.truncf %0 : vector<128x64xf32> to vector<128x64xbf16>
    %17 = arith.truncf %14 : vector<64x33xf32> to vector<64x33xbf16>
    %cst_10 = arith.constant dense<0.000000e+00> : vector<128x33xf32>
    %18 = tpu.matmul %16, %17, %cst_10 {dimension_numbers = #tpu.dot_dimension_numbers<[1], [0], [0], [1], [0, 0, 1, 1], [], []>} : vector<128x64xbf16>, vector<64x33xbf16>, vector<128x33xf32> -> vector<128x33xf32>
    %19 = vector.extract_strided_slice %18 {offsets = [0, 0], sizes = [128, 32], strides = [1, 1]} : vector<128x33xf32> to vector<128x32xf32>
    %20 = vector.extract_strided_slice %18 {offsets = [0, 32], sizes = [128, 1], strides = [1, 1]} : vector<128x33xf32> to vector<128x1xf32>
    %cst_11 = arith.constant dense<0.000000e+00> : vector<1x128xf32>
    %21 = tpu.matmul %15, %19, %cst_11 {dimension_numbers = #tpu.dot_dimension_numbers<[1], [1], [0], [0], [0, 0, 1, 0], [], []>} : vector<1x32xf32>, vector<128x32xf32>, vector<1x128xf32> -> vector<1x128xf32>
    %22 = vector.broadcast %20 : vector<128x1xf32> to vector<128x128xf32>
    %23 = vector.broadcast %21 : vector<1x128xf32> to vector<128x128xf32>
    %24 = arith.addf %22, %23 : vector<128x128xf32>
    %25 = arith.mulf %24, %13 : vector<128x128xf32>
    %cst_12 = arith.constant 0.000000e+00 : f32
    %26 = vector.broadcast %cst_12 : f32 to vector<128x128xf32>
    %27 = arith.cmpf ogt, %25, %26 : vector<128x128xf32>
    %cst_13 = arith.constant 2.000000e-01 : f32
    %28 = vector.broadcast %cst_13 : f32 to vector<128x128xf32>
    %29 = arith.mulf %28, %25 : vector<128x128xf32>
    %30 = arith.select %27, %25, %29 : vector<128x128xi1>, vector<128x128xf32>
    %cst_14 = arith.constant 0.000000e+00 : f32
    %31 = vector.broadcast %cst_14 : f32 to vector<128x128xf32>
    %32 = arith.cmpf ogt, %1, %31 : vector<128x128xf32>
    %cst_15 = arith.constant -9.000000e+15 : f32
    %33 = vector.broadcast %cst_15 : f32 to vector<128x128xf32>
    %34 = arith.select %32, %30, %33 : vector<128x128xi1>, vector<128x128xf32>
    %cst_16 = arith.constant dense<0xFF800000> : vector<128xf32>
    %35 = vector.multi_reduction <maximumf>, %34, %cst_16 [1] : vector<128x128xf32> to vector<128xf32>
    %36 = vector.shape_cast %35 : vector<128xf32> to vector<128x1xf32>
    %37 = vector.broadcast %36 : vector<128x1xf32> to vector<128x128xf32>
    %38 = arith.subf %34, %37 : vector<128x128xf32>
    %39 = math.exp %38 : vector<128x128xf32>
    %cst_17 = arith.constant dense<0.000000e+00> : vector<128xf32>
    %40 = vector.multi_reduction <add>, %39, %cst_17 [1] : vector<128x128xf32> to vector<128xf32>
    %41 = vector.shape_cast %40 : vector<128xf32> to vector<128x1xf32>
    %42 = arith.truncf %39 : vector<128x128xf32> to vector<128x128xbf16>
    %43 = arith.truncf %19 : vector<128x32xf32> to vector<128x32xbf16>
    %cst_18 = arith.constant dense<0.000000e+00> : vector<128x32xf32>
    %44 = tpu.matmul %42, %43, %cst_18 {dimension_numbers = #tpu.dot_dimension_numbers<[1], [0], [0], [1], [0, 0, 1, 1], [], []>} : vector<128x128xbf16>, vector<128x32xbf16>, vector<128x32xf32> -> vector<128x32xf32>
    %45 = tpu.reciprocal %41 {approx = true} : vector<128x1xf32> -> vector<128x1xf32>
    %46 = vector.broadcast %45 : vector<128x1xf32> to vector<128x32xf32>
    %47 = arith.mulf %44, %46 : vector<128x32xf32>
    %cst_19 = arith.constant 0.000000e+00 : f32
    %48 = vector.broadcast %cst_19 : f32 to vector<128x32xf32>
    %49 = arith.cmpf ogt, %47, %48 : vector<128x32xf32>
    %cst_20 = arith.constant 0.000000e+00 : f32
    %50 = vector.broadcast %cst_20 : f32 to vector<128x32xf32>
    %51 = arith.minimumf %47, %50 : vector<128x32xf32>
    %52 = math.exp %51 : vector<128x32xf32>
    %cst_21 = arith.constant 1.000000e+00 : f32
    %53 = vector.broadcast %cst_21 : f32 to vector<128x32xf32>
    %54 = arith.subf %52, %53 : vector<128x32xf32>
    %55 = arith.select %49, %47, %54 : vector<128x32xi1>, vector<128x32xf32>
    %c0_22 = arith.constant 0 : index
    %c0_23 = arith.constant 0 : index
    %56 = vector.load %arg4[%c0_22, %c0_23] : memref<32x17xf32, #tpu.memory_space<vmem>>, vector<32x17xf32>
    %c0_24 = arith.constant 0 : index
    %c0_25 = arith.constant 0 : index
    %57 = vector.load %arg5[%c0_24, %c0_25] : memref<1x16xf32, #tpu.memory_space<vmem>>, vector<1x16xf32>
    %58 = arith.truncf %55 : vector<128x32xf32> to vector<128x32xbf16>
    %59 = arith.truncf %56 : vector<32x17xf32> to vector<32x17xbf16>
    %cst_26 = arith.constant dense<0.000000e+00> : vector<128x17xf32>
    %60 = tpu.matmul %58, %59, %cst_26 {dimension_numbers = #tpu.dot_dimension_numbers<[1], [0], [0], [1], [0, 0, 1, 1], [], []>} : vector<128x32xbf16>, vector<32x17xbf16>, vector<128x17xf32> -> vector<128x17xf32>
    %61 = vector.extract_strided_slice %60 {offsets = [0, 0], sizes = [128, 16], strides = [1, 1]} : vector<128x17xf32> to vector<128x16xf32>
    %62 = vector.extract_strided_slice %60 {offsets = [0, 16], sizes = [128, 1], strides = [1, 1]} : vector<128x17xf32> to vector<128x1xf32>
    %cst_27 = arith.constant dense<0.000000e+00> : vector<1x128xf32>
    %63 = tpu.matmul %57, %61, %cst_27 {dimension_numbers = #tpu.dot_dimension_numbers<[1], [1], [0], [0], [0, 0, 1, 0], [], []>} : vector<1x16xf32>, vector<128x16xf32>, vector<1x128xf32> -> vector<1x128xf32>
    %64 = vector.broadcast %62 : vector<128x1xf32> to vector<128x128xf32>
    %65 = vector.broadcast %63 : vector<1x128xf32> to vector<128x128xf32>
    %66 = arith.addf %64, %65 : vector<128x128xf32>
    %67 = arith.mulf %66, %13 : vector<128x128xf32>
    %cst_28 = arith.constant 0.000000e+00 : f32
    %68 = vector.broadcast %cst_28 : f32 to vector<128x128xf32>
    %69 = arith.cmpf ogt, %67, %68 : vector<128x128xf32>
    %cst_29 = arith.constant 2.000000e-01 : f32
    %70 = vector.broadcast %cst_29 : f32 to vector<128x128xf32>
    %71 = arith.mulf %70, %67 : vector<128x128xf32>
    %72 = arith.select %69, %67, %71 : vector<128x128xi1>, vector<128x128xf32>
    %cst_30 = arith.constant 0.000000e+00 : f32
    %73 = vector.broadcast %cst_30 : f32 to vector<128x128xf32>
    %74 = arith.cmpf ogt, %1, %73 : vector<128x128xf32>
    %cst_31 = arith.constant -9.000000e+15 : f32
    %75 = vector.broadcast %cst_31 : f32 to vector<128x128xf32>
    %76 = arith.select %74, %72, %75 : vector<128x128xi1>, vector<128x128xf32>
    %cst_32 = arith.constant dense<0xFF800000> : vector<128xf32>
    %77 = vector.multi_reduction <maximumf>, %76, %cst_32 [1] : vector<128x128xf32> to vector<128xf32>
    %78 = vector.shape_cast %77 : vector<128xf32> to vector<128x1xf32>
    %79 = vector.broadcast %78 : vector<128x1xf32> to vector<128x128xf32>
    %80 = arith.subf %76, %79 : vector<128x128xf32>
    %81 = math.exp %80 : vector<128x128xf32>
    %cst_33 = arith.constant dense<0.000000e+00> : vector<128xf32>
    %82 = vector.multi_reduction <add>, %81, %cst_33 [1] : vector<128x128xf32> to vector<128xf32>
    %83 = vector.shape_cast %82 : vector<128xf32> to vector<128x1xf32>
    %84 = arith.truncf %81 : vector<128x128xf32> to vector<128x128xbf16>
    %85 = arith.truncf %61 : vector<128x16xf32> to vector<128x16xbf16>
    %cst_34 = arith.constant dense<0.000000e+00> : vector<128x16xf32>
    %86 = tpu.matmul %84, %85, %cst_34 {dimension_numbers = #tpu.dot_dimension_numbers<[1], [0], [0], [1], [0, 0, 1, 1], [], []>} : vector<128x128xbf16>, vector<128x16xbf16>, vector<128x16xf32> -> vector<128x16xf32>
    %87 = tpu.reciprocal %83 {approx = true} : vector<128x1xf32> -> vector<128x1xf32>
    %88 = vector.broadcast %87 : vector<128x1xf32> to vector<128x16xf32>
    %89 = arith.mulf %86, %88 : vector<128x16xf32>
    %cst_35 = arith.constant 0.000000e+00 : f32
    %90 = vector.broadcast %cst_35 : f32 to vector<128x16xf32>
    %91 = arith.cmpf ogt, %89, %90 : vector<128x16xf32>
    %cst_36 = arith.constant 0.000000e+00 : f32
    %92 = vector.broadcast %cst_36 : f32 to vector<128x16xf32>
    %93 = arith.minimumf %89, %92 : vector<128x16xf32>
    %94 = math.exp %93 : vector<128x16xf32>
    %cst_37 = arith.constant 1.000000e+00 : f32
    %95 = vector.broadcast %cst_37 : f32 to vector<128x16xf32>
    %96 = arith.subf %94, %95 : vector<128x16xf32>
    %97 = arith.select %91, %89, %96 : vector<128x16xi1>, vector<128x16xf32>
    %98 = arith.mulf %97, %97 : vector<128x16xf32>
    %cst_38 = arith.constant dense<0.000000e+00> : vector<128xf32>
    %99 = vector.multi_reduction <add>, %98, %cst_38 [1] : vector<128x16xf32> to vector<128xf32>
    %100 = vector.shape_cast %99 : vector<128xf32> to vector<128x1xf32>
    %cst_39 = arith.constant 1.000000e-24 : f32
    %101 = vector.broadcast %cst_39 : f32 to vector<128x1xf32>
    %102 = arith.addf %100, %101 : vector<128x1xf32>
    %103 = math.rsqrt %102 : vector<128x1xf32>
    %104 = vector.broadcast %103 : vector<128x1xf32> to vector<128x16xf32>
    %105 = arith.mulf %97, %104 : vector<128x16xf32>
    %106 = arith.truncf %105 : vector<128x16xf32> to vector<128x16xbf16>
    %cst_40 = arith.constant dense<0.000000e+00> : vector<128x128xf32>
    %107 = tpu.matmul %106, %106, %cst_40 {dimension_numbers = #tpu.dot_dimension_numbers<[1], [1], [0], [0], [0, 0, 1, 0], [], []>} : vector<128x16xbf16>, vector<128x16xbf16>, vector<128x128xf32> -> vector<128x128xf32>
    %cst_41 = arith.constant 5.000000e-01 : f32
    %108 = vector.broadcast %cst_41 : f32 to vector<128x128xf32>
    %109 = arith.mulf %108, %107 : vector<128x128xf32>
    %110 = math.tanh %109 : vector<128x128xf32>
    %cst_42 = arith.constant 1.000000e+00 : f32
    %111 = vector.broadcast %cst_42 : f32 to vector<128x128xf32>
    %112 = arith.addf %110, %111 : vector<128x128xf32>
    %cst_43 = arith.constant 5.000000e-01 : f32
    %113 = vector.broadcast %cst_43 : f32 to vector<128x128xf32>
    %114 = arith.mulf %113, %112 : vector<128x128xf32>
    %c0_44 = arith.constant 0 : index
    %c0_45 = arith.constant 0 : index
    %115 = vector.load %arg7[%c0_44, %c0_45] : memref<128x128xf32, #tpu.memory_space<vmem>>, vector<128x128xf32>
    tpu.vector_store %arg7[%c0_44, %c0_45], %114 {strides = array<i32>} : memref<128x128xf32, #tpu.memory_space<vmem>>, vector<128x128xf32>,
    %c0_46 = arith.constant 0 : index
    %c0_47 = arith.constant 0 : index
    %116 = vector.load %arg6[%c0_46, %c0_47] : memref<8x16xf32, #tpu.memory_space<vmem>>, vector<8x16xf32>
    %117 = arith.mulf %103, %103 : vector<128x1xf32>
    %118 = arith.mulf %100, %117 : vector<128x1xf32>
    %cst_48 = arith.constant 1.000000e+00 : f32
    %119 = vector.broadcast %cst_48 : f32 to vector<1x16xf32>
    %120 = arith.mulf %116, %116 : vector<8x16xf32>
    %cst_49 = arith.constant dense<0.000000e+00> : vector<1x8xf32>
    %121 = tpu.matmul %119, %120, %cst_49 {dimension_numbers = #tpu.dot_dimension_numbers<[1], [1], [0], [0], [0, 0, 1, 0], [], []>} : vector<1x16xf32>, vector<8x16xf32>, vector<1x8xf32> -> vector<1x8xf32>
    %122 = arith.truncf %116 : vector<8x16xf32> to vector<8x16xbf16>
    %cst_50 = arith.constant dense<0.000000e+00> : vector<128x8xf32>
    %123 = tpu.matmul %106, %122, %cst_50 {dimension_numbers = #tpu.dot_dimension_numbers<[1], [1], [0], [0], [0, 0, 1, 0], [], []>} : vector<128x16xbf16>, vector<8x16xbf16>, vector<128x8xf32> -> vector<128x8xf32>
    %124 = vector.broadcast %118 : vector<128x1xf32> to vector<128x8xf32>
    %125 = vector.broadcast %121 : vector<1x8xf32> to vector<128x8xf32>
    %126 = arith.addf %124, %125 : vector<128x8xf32>
    %cst_51 = arith.constant 2.000000e+00 : f32
    %127 = vector.broadcast %cst_51 : f32 to vector<128x8xf32>
    %128 = arith.mulf %127, %123 : vector<128x8xf32>
    %129 = arith.subf %126, %128 : vector<128x8xf32>
    %cst_52 = arith.constant 0.000000e+00 : f32
    %130 = vector.broadcast %cst_52 : f32 to vector<128x8xf32>
    %131 = arith.maximumf %129, %130 : vector<128x8xf32>
    %cst_53 = arith.constant 1.000000e+00 : f32
    %132 = vector.broadcast %cst_53 : f32 to vector<128x8xf32>
    %133 = arith.mulf %131, %132 : vector<128x8xf32>
    %cst_54 = arith.constant 1.000000e+00 : f32
    %134 = vector.broadcast %cst_54 : f32 to vector<128x8xf32>
    %135 = arith.addf %134, %133 : vector<128x8xf32>
    %136 = tpu.reciprocal %135 : vector<128x8xf32> -> vector<128x8xf32>
    %cst_55 = arith.constant dense<0.000000e+00> : vector<128xf32>
    %137 = vector.multi_reduction <add>, %136, %cst_55 [1] : vector<128x8xf32> to vector<128xf32>
    %138 = vector.shape_cast %137 : vector<128xf32> to vector<128x1xf32>
    %139 = tpu.reciprocal %138 : vector<128x1xf32> -> vector<128x1xf32>
    %140 = vector.broadcast %139 : vector<128x1xf32> to vector<128x8xf32>
    %141 = arith.mulf %136, %140 : vector<128x8xf32>
    %cst_56 = arith.constant 0.000000e+00 : f32
    %142 = vector.broadcast %cst_56 : f32 to vector<128x128xf32>
    %c0_57 = arith.constant 0 : index
    %c0_58 = arith.constant 0 : index
    %143 = vector.load %arg8[%c0_57, %c0_58] : memref<128x128xf32, #tpu.memory_space<vmem>>, vector<128x128xf32>
    tpu.vector_store %arg8[%c0_57, %c0_58], %142 {strides = array<i32>} : memref<128x128xf32, #tpu.memory_space<vmem>>, vector<128x128xf32>,
    %c0_59 = arith.constant 0 : index
    %c0_60 = arith.constant 0 : index
    %144 = vector.load %arg8[%c0_59, %c0_60] : memref<128x128xf32, #tpu.memory_space<vmem>>, vector<128x16xf32>
    tpu.vector_store %arg8[%c0_59, %c0_60], %105 {strides = array<i32>} : memref<128x128xf32, #tpu.memory_space<vmem>>, vector<128x16xf32>,
    %c0_61 = arith.constant 0 : index
    %c16 = arith.constant 16 : index
    %145 = vector.load %arg8[%c0_61, %c16] : memref<128x128xf32, #tpu.memory_space<vmem>>, vector<128x8xf32>
    tpu.vector_store %arg8[%c0_61, %c16], %141 {strides = array<i32>} : memref<128x128xf32, #tpu.memory_space<vmem>>, vector<128x8xf32>,
    return
  }
}

</mosaic_0001>

<llo_original>
// kernel: tpu_custom_call.1
$region0: #{tpu_custom_call.1}
  #allocation0 [shape = 'u32[]', space=smem, size = 0x4, offset = 0x4, fixed_abs, tag = 'smem constant byte address 0x4 - core index']
  #allocation1 [shape = 'u32[72,128]{1,0:T(1,128)}', space=vmem, size = 0x9000, scoped, tag = 'internal scratch']
  %s0 = inlined_call_operand.vmem [shape: f32[128,64], index: 0, kind: input, shape index: {}]
  %s1 = inlined_call_operand.vmem [shape: f32[128,128], index: 1, kind: input, shape index: {}]
  %s2 = inlined_call_operand.vmem [shape: f32[64,33], index: 2, kind: input, shape index: {}]
  %s3 = inlined_call_operand.vmem [shape: f32[1,32], index: 3, kind: input, shape index: {}]
  %s4 = inlined_call_operand.vmem [shape: f32[32,17], index: 4, kind: input, shape index: {}]
  %s5 = inlined_call_operand.vmem [shape: f32[1,16], index: 5, kind: input, shape index: {}]
  %s6 = inlined_call_operand.vmem [shape: f32[8,16], index: 6, kind: input, shape index: {}]
  %s7 = inlined_call_operand.hbm [shape: f32[128,128], index: 7, kind: output, shape index: {0}]
  %s8 = inlined_call_operand.hbm [shape: f32[128,128], index: 8, kind: output, shape index: {1}]
  %9 = xla_tuple %s7, %s8
  %s10 = sld [smem:[#allocation0]]
  $region46: #{tpu_custom_call.1} parent=0
    _
  %s12 = ssub.s32 1, %s10
  %s13 = scalar_select 0, %s12, %s10
  $region1: #{tpu_custom_call.1} parent=0
    #allocation2 [shape = 'u8[65536]{0}', space=vmem, size = 0x10000, scoped, tag = 'output window, operand 0, single buffered']
    #allocation3 [shape = 's32[1]{0}', space=sflag, size = 0x4, scoped, tag = 'scoped memory for tpu_custom_call.1']
    #allocation4 [shape = 'u8[65536]{0}', space=vmem, size = 0x10000, scoped, tag = 'output window, operand 1, single buffered']
    #allocation5 [shape = 's32[1]{0}', space=sflag, size = 0x4, scoped, tag = 'scoped memory for tpu_custom_call.1']
    %14 = vsyncpa [#allocation3], 0
    %15 = vsyncpa [#allocation5], 0
    // Predicated region
    $region2: #{tpu_custom_call.1} parent=1 // pred_check
      _
    $region3: #{tpu_custom_call.1} parent=1 // pred_check_branch
      %17 = sbr.rel (0) target = $region5
    $region4: #{tpu_custom_call.1} parent=1 // pred_region
      _
    $region5: #{tpu_custom_call.1} parent=1 // pred_fallthru
      _
    // Predicated region
    $region6: #{tpu_custom_call.1} parent=1 // pred_check
      _
    $region7: #{tpu_custom_call.1} parent=1 // pred_check_branch
      %19 = sbr.rel (0) target = $region9
    $region8: #{tpu_custom_call.1} parent=1 // pred_region
      _
    $region9: #{tpu_custom_call.1} parent=1 // pred_fallthru
      _
    // Predicated region
    $region10: #{tpu_custom_call.1} parent=1 // pred_check
      _
    $region11: #{tpu_custom_call.1} parent=1 // pred_check_branch
      %21 = sbr.rel (0) target = $region13
    $region12: #{tpu_custom_call.1} parent=1 // pred_region
      _
    $region13: #{tpu_custom_call.1} parent=1 // pred_fallthru
      _
    // Predicated region
    $region14: #{tpu_custom_call.1} parent=1 // pred_check
      _
    $region15: #{tpu_custom_call.1} parent=1 // pred_check_branch
      %23 = sbr.rel (0) target = $region17
    $region16: #{tpu_custom_call.1} parent=1 // pred_region
      _
    $region17: #{tpu_custom_call.1} parent=1 // pred_fallthru
      _
    // Predicated region
    $region18: #{tpu_custom_call.1} parent=1 // pred_check
      _
    $region19: #{tpu_custom_call.1} parent=1 // pred_check_branch
      %25 = sbr.rel (0) target = $region21
    $region20: #{tpu_custom_call.1} parent=1 // pred_region
      _
    $region21: #{tpu_custom_call.1} parent=1 // pred_fallthru
      _
    // Predicated region
    $region22: #{tpu_custom_call.1} parent=1 // pred_check
      _
    $region23: #{tpu_custom_call.1} parent=1 // pred_check_branch
      %27 = sbr.rel (0) target = $region25
    $region24: #{tpu_custom_call.1} parent=1 // pred_region
      _
    $region25: #{tpu_custom_call.1} parent=1 // pred_fallthru
      _
    // Predicated region
    $region26: #{tpu_custom_call.1} parent=1 // pred_check
      _
    $region27: #{tpu_custom_call.1} parent=1 // pred_check_branch
      %29 = sbr.rel (0) target = $region29
    $region28: #{tpu_custom_call.1} parent=1 // pred_region
      _
    $region29: #{tpu_custom_call.1} parent=1 // pred_fallthru
      _
    %v31 = vld [vmem:[%s0] sm:$0xff]
    %v32 = vld [vmem:[%s0 + $0x8] sm:$0xff]
    %v33 = vld [vmem:[%s0 + $0x10] sm:$0xff]
    %v34 = vld [vmem:[%s0 + $0x18] sm:$0xff]
    %v35 = vld [vmem:[%s0 + $0x20] sm:$0xff]
    %v36 = vld [vmem:[%s0 + $0x28] sm:$0xff]
    %v37 = vld [vmem:[%s0 + $0x30] sm:$0xff]
    %v38 = vld [vmem:[%s0 + $0x38] sm:$0xff]
    %v39 = vld [vmem:[%s0 + $0x40] sm:$0xff]
    %v40 = vld [vmem:[%s0 + $0x48] sm:$0xff]
    %v41 = vld [vmem:[%s0 + $0x50] sm:$0xff]
    %v42 = vld [vmem:[%s0 + $0x58] sm:$0xff]
    %v43 = vld [vmem:[%s0 + $0x60] sm:$0xff]
    %v44 = vld [vmem:[%s0 + $0x68] sm:$0xff]
    %v45 = vld [vmem:[%s0 + $0x70] sm:$0xff]
    %v46 = vld [vmem:[%s0 + $0x78] sm:$0xff]
    %v47 = vld [vmem:[%s1] sm:$0xff]
    %v48 = vld [vmem:[%s1 + $0x8] sm:$0xff]
    %v49 = vld [vmem:[%s1 + $0x10] sm:$0xff]
    %v50 = vld [vmem:[%s1 + $0x18] sm:$0xff]
    %v51 = vld [vmem:[%s1 + $0x20] sm:$0xff]
    %v52 = vld [vmem:[%s1 + $0x28] sm:$0xff]
    %v53 = vld [vmem:[%s1 + $0x30] sm:$0xff]
    %v54 = vld [vmem:[%s1 + $0x38] sm:$0xff]
    %v55 = vld [vmem:[%s1 + $0x40] sm:$0xff]
    %v56 = vld [vmem:[%s1 + $0x48] sm:$0xff]
    %v57 = vld [vmem:[%s1 + $0x50] sm:$0xff]
    %v58 = vld [vmem:[%s1 + $0x58] sm:$0xff]
    %v59 = vld [vmem:[%s1 + $0x60] sm:$0xff]
    %v60 = vld [vmem:[%s1 + $0x68] sm:$0xff]
    %v61 = vld [vmem:[%s1 + $0x70] sm:$0xff]
    %v62 = vld [vmem:[%s1 + $0x78] sm:$0xff]
    %v63 = vadd.f32 %v47, %v48
    %v64 = vadd.f32 %v63, %v49
    %v65 = vadd.f32 %v64, %v50
    %v66 = vadd.f32 %v65, %v51
    %v67 = vadd.f32 %v66, %v52
    %v68 = vadd.f32 %v67, %v53
    %v69 = vadd.f32 %v68, %v54
    %v70 = vadd.f32 %v69, %v55
    %v71 = vadd.f32 %v70, %v56
    %v72 = vadd.f32 %v71, %v57
    %v73 = vadd.f32 %v72, %v58
    %v74 = vadd.f32 %v73, %v59
    %v75 = vadd.f32 %v74, %v60
    %v76 = vadd.f32 %v75, %v61
    %v77 = vadd.f32 %v76, %v62
    %v78 = vrot.slane %v77, 4
    %v79 = vadd.f32 %v77, %v78
    %v80 = vrot.slane %v79, 2
    %v81 = vadd.f32 %v79, %v80
    %v82 = vrot.slane %v81, 1
    %v83 = vadd.f32 %v81, %v82
    %v84 = vmax.f32 %v83, 1e-12
    %v85 = vrcp.pop %v84
    %v86 = vmul.f32 %v84, %v85
    %v87 = vsub.f32 1.0, %v86
    %v88 = vmul.f32 %v85, %v87
    %v89 = vadd.f32 %v85, %v88
    %vm90 = vweird.f32 %v84
    %vm91 = vweird.f32 %v85
    %vm92 = vmor %vm90, %vm91
    %v93 = vsel %vm92, %v85, %v89
    %v94 = vand.u32 2147483647, %v84
    %vm95 = vcmp.eq.f32.partialorder %v94, 8.507059e+37
    %v96 = vand.u32 %v84, 2147483648
    %v97 = vor.u32 1.1754944e-38, %v96
    %v98 = vsel %vm95, %v97, %v93
    %v99 = vmul.f32 %v47, %v98
    %v100 = vmul.f32 %v48, %v98
    %v101 = vmul.f32 %v49, %v98
    %v102 = vmul.f32 %v50, %v98
    %v103 = vmul.f32 %v51, %v98
    %v104 = vmul.f32 %v52, %v98
    %v105 = vmul.f32 %v53, %v98
    %v106 = vmul.f32 %v54, %v98
    %v107 = vmul.f32 %v55, %v98
    %v108 = vmul.f32 %v56, %v98
    %v109 = vmul.f32 %v57, %v98
    %v110 = vmul.f32 %v58, %v98
    %v111 = vmul.f32 %v59, %v98
    %v112 = vmul.f32 %v60, %v98
    %v113 = vmul.f32 %v61, %v98
    %v114 = vmul.f32 %v62, %v98
    %v115 = vpack.c.bf16 %v100, %v99
    %v116 = vpack.c.bf16 %v102, %v101
    %v117 = vpack.c.bf16 %v104, %v103
    %v118 = vpack.c.bf16 %v106, %v105
    %v119 = vpack.c.bf16 %v108, %v107
    %v120 = vpack.c.bf16 %v110, %v109
    %v121 = vpack.c.bf16 %v112, %v111
    %v122 = vpack.c.bf16 %v114, %v113
    %123 = vmatpush.bf16.msra.mxu0 %v122
    %124 = vmatpush.bf16.msra.mxu0 %v121
    %125 = vmatpush.bf16.msra.mxu0 %v120
    %126 = vmatpush.bf16.msra.mxu0 %v119
    %127 = vmatpush.bf16.msra.mxu0 %v118
    %128 = vmatpush.bf16.msra.mxu0 %v117
    %129 = vmatpush.bf16.msra.mxu0 %v116
    %130 = vmatpush.bf16.msra.mxu0 %v115
    %131 = vmatmul.bf16.gmra.mxu0 %v115
    %v132 = vpop.f32.mrf.mxu0
    %v133 = vadd.f32 0.0, %v132
    %v134 = vpop.f32.mrf.mxu0
    %v135 = vadd.f32 0.0, %v134
    %136 = vmatmul.bf16.gmra.mxu0 %v116
    %v137 = vpop.f32.mrf.mxu0
    %v138 = vadd.f32 0.0, %v137
    %v139 = vpop.f32.mrf.mxu0
    %v140 = vadd.f32 0.0, %v139
    %141 = vmatmul.bf16.gmra.mxu0 %v117
    %v142 = vpop.f32.mrf.mxu0
    %v143 = vadd.f32 0.0, %v142
    %v144 = vpop.f32.mrf.mxu0
    %v145 = vadd.f32 0.0, %v144
    %146 = vmatmul.bf16.gmra.mxu0 %v118
    %v147 = vpop.f32.mrf.mxu0
    %v148 = vadd.f32 0.0, %v147
    %v149 = vpop.f32.mrf.mxu0
    %v150 = vadd.f32 0.0, %v149
    %151 = vmatmul.bf16.gmra.mxu0 %v119
    %v152 = vpop.f32.mrf.mxu0
    %v153 = vadd.f32 0.0, %v152
    %v154 = vpop.f32.mrf.mxu0
    %v155 = vadd.f32 0.0, %v154
    %156 = vmatmul.bf16.gmra.mxu0 %v120
    %v157 = vpop.f32.mrf.mxu0
    %v158 = vadd.f32 0.0, %v157
    %v159 = vpop.f32.mrf.mxu0
    %v160 = vadd.f32 0.0, %v159
    %161 = vmatmul.bf16.gmra.mxu0 %v121
    %v162 = vpop.f32.mrf.mxu0
    %v163 = vadd.f32 0.0, %v162
    %v164 = vpop.f32.mrf.mxu0
    %v165 = vadd.f32 0.0, %v164
    %166 = vmatmul.bf16.gmra.mxu0 %v122
    %v167 = vpop.f32.mrf.mxu0
    %v168 = vadd.f32 0.0, %v167
    %v169 = vpop.f32.mrf.mxu0
    %v170 = vadd.f32 0.0, %v169
    %171 = vdwg.mxu0
    %v172 = vadd.f32 %v99, %v133
    %v173 = vadd.f32 %v100, %v135
    %v174 = vadd.f32 %v101, %v138
    %v175 = vadd.f32 %v102, %v140
    %v176 = vadd.f32 %v103, %v143
    %v177 = vadd.f32 %v104, %v145
    %v178 = vadd.f32 %v105, %v148
    %v179 = vadd.f32 %v106, %v150
    %v180 = vadd.f32 %v107, %v153
    %v181 = vadd.f32 %v108, %v155
    %v182 = vadd.f32 %v109, %v158
    %v183 = vadd.f32 %v110, %v160
    %v184 = vadd.f32 %v111, %v163
    %v185 = vadd.f32 %v112, %v165
    %v186 = vadd.f32 %v113, %v168
    %v187 = vadd.f32 %v114, %v170
    %v188 = vmul.f32 %v172, 0.5
    %v189 = vmul.f32 %v173, 0.5
    %v190 = vmul.f32 %v174, 0.5
    %v191 = vmul.f32 %v175, 0.5
    %v192 = vmul.f32 %v176, 0.5
    %v193 = vmul.f32 %v177, 0.5
    %v194 = vmul.f32 %v178, 0.5
    %v195 = vmul.f32 %v179, 0.5
    %v196 = vmul.f32 %v180, 0.5
    %v197 = vmul.f32 %v181, 0.5
    %v198 = vmul.f32 %v182, 0.5
    %v199 = vmul.f32 %v183, 0.5
    %v200 = vmul.f32 %v184, 0.5
    %v201 = vmul.f32 %v185, 0.5
    %v202 = vmul.f32 %v186, 0.5
    %v203 = vmul.f32 %v187, 0.5
    %v204 = vld [vmem:[%s2] sm:$0xff]
    %v205 = vld [vmem:[%s2 + $0x8] sm:$0xff]
    %v206 = vld [vmem:[%s2 + $0x10] sm:$0xff]
    %v207 = vld [vmem:[%s2 + $0x18] sm:$0xff]
    %v208 = vld [vmem:[%s2 + $0x20] sm:$0xff]
    %v209 = vld [vmem:[%s2 + $0x28] sm:$0xff]
    %v210 = vld [vmem:[%s2 + $0x30] sm:$0xff]
    %v211 = vld [vmem:[%s2 + $0x38] sm:$0xff]
    %v212 = vld [vmem:[%s3] sm:$0x1]
    %v213 = vpack.c.bf16 %v32, %v31
    %v214 = vpack.c.bf16 %v34, %v33
    %v215 = vpack.c.bf16 %v36, %v35
    %v216 = vpack.c.bf16 %v38, %v37
    %v217 = vpack.c.bf16 %v40, %v39
    %v218 = vpack.c.bf16 %v42, %v41
    %v219 = vpack.c.bf16 %v44, %v43
    %v220 = vpack.c.bf16 %v46, %v45
    %v221 = vpack.c.bf16 %v205, %v204
    %v222 = vpack.c.bf16 %v207, %v206
    %v223 = vpack.c.bf16 %v209, %v208
    %v224 = vpack.c.bf16 %v211, %v210
    %vm225 = vcmask 523264
    %v227 = vsel %vm225, %v213, 0
    %v230 = vsel %vm225, %v214, 0
    %v233 = vsel %vm225, %v215, 0
    %v236 = vsel %vm225, %v216, 0
    %v239 = vsel %vm225, %v217, 0
    %v242 = vsel %vm225, %v218, 0
    %v245 = vsel %vm225, %v219, 0
    %v248 = vsel %vm225, %v220, 0
    %250 = vmatpush.bf16.msra.mxu0 0
    %251 = vmatpush.bf16.msra.mxu0 0
    %252 = vmatpush.bf16.msra.mxu0 0
    %253 = vmatpush.bf16.msra.mxu0 0
    %254 = vmatpush.bf16.msra.mxu0 %v224
    %255 = vmatpush.bf16.msra.mxu0 %v223
    %256 = vmatpush.bf16.msra.mxu0 %v222
    %257 = vmatpush.bf16.msra.mxu0 %v221
    %258 = vmatmul.bf16.gmra.mxu0 %v227
    %v259 = vpop.f32.mrf.mxu0
    %v260 = vadd.f32 0.0, %v259
    %v261 = vpop.f32.mrf.mxu0
    %v262 = vadd.f32 0.0, %v261
    %263 = vmatmul.bf16.gmra.mxu0 %v230
    %v264 = vpop.f32.mrf.mxu0
    %v265 = vadd.f32 0.0, %v264
    %v266 = vpop.f32.mrf.mxu0
    %v267 = vadd.f32 0.0, %v266
    %268 = vmatmul.bf16.gmra.mxu0 %v233
    %v269 = vpop.f32.mrf.mxu0
    %v270 = vadd.f32 0.0, %v269
    %v271 = vpop.f32.mrf.mxu0
    %v272 = vadd.f32 0.0, %v271
    %273 = vmatmul.bf16.gmra.mxu0 %v236
    %v274 = vpop.f32.mrf.mxu0
    %v275 = vadd.f32 0.0, %v274
    %v276 = vpop.f32.mrf.mxu0
    %v277 = vadd.f32 0.0, %v276
    %278 = vmatmul.bf16.gmra.mxu0 %v239
    %v279 = vpop.f32.mrf.mxu0
    %v280 = vadd.f32 0.0, %v279
    %v281 = vpop.f32.mrf.mxu0
    %v282 = vadd.f32 0.0, %v281
    %283 = vmatmul.bf16.gmra.mxu0 %v242
    %v284 = vpop.f32.mrf.mxu0
    %v285 = vadd.f32 0.0, %v284
    %v286 = vpop.f32.mrf.mxu0
    %v287 = vadd.f32 0.0, %v286
    %288 = vmatmul.bf16.gmra.mxu0 %v245
    %v289 = vpop.f32.mrf.mxu0
    %v290 = vadd.f32 0.0, %v289
    %v291 = vpop.f32.mrf.mxu0
    %v292 = vadd.f32 0.0, %v291
    %293 = vmatmul.bf16.gmra.mxu0 %v248
    %v294 = vpop.f32.mrf.mxu0
    %v295 = vadd.f32 0.0, %v294
    %v296 = vpop.f32.mrf.mxu0
    %v297 = vadd.f32 0.0, %v296
    %298 = vdwg.mxu0
    %vm299 = vcmask 261120
    %v301 = vsel %vm299, %v212, 0
    %v304 = vsel %vm299, %v260, 0
    %v307 = vsel %vm299, %v262, 0
    %v310 = vsel %vm299, %v265, 0
    %v313 = vsel %vm299, %v267, 0
    %v316 = vsel %vm299, %v270, 0
    %v319 = vsel %vm299, %v272, 0
    %v322 = vsel %vm299, %v275, 0
    %v325 = vsel %vm299, %v277, 0
    %v328 = vsel %vm299, %v280, 0
    %v331 = vsel %vm299, %v282, 0
    %v334 = vsel %vm299, %v285, 0
    %v337 = vsel %vm299, %v287, 0
    %v340 = vsel %vm299, %v290, 0
    %v343 = vsel %vm299, %v292, 0
    %v346 = vsel %vm299, %v295, 0
    %v349 = vsel %vm299, %v297, 0
    %351 = vmatpush.xpose.msra.mxu0 %v349
    %352 = vmatpush.xpose.msra.mxu0 %v346
    %353 = vmatpush.xpose.msra.mxu0 %v343
    %354 = vmatpush.xpose.msra.mxu0 %v340
    %355 = vmatpush.xpose.msra.mxu0 %v337
    %356 = vmatpush.xpose.msra.mxu0 %v334
    %357 = vmatpush.xpose.msra.mxu0 %v331
    %358 = vmatpush.xpose.msra.mxu0 %v328
    %359 = vmatpush.xpose.msra.mxu0 %v325
    %360 = vmatpush.xpose.msra.mxu0 %v322
    %361 = vmatpush.xpose.msra.mxu0 %v319
    %362 = vmatpush.xpose.msra.mxu0 %v316
    %363 = vmatpush.xpose.msra.mxu0 %v313
    %364 = vmatpush.xpose.msra.mxu0 %v310
    %365 = vmatpush.xpose.msra.mxu0 %v307
    %366 = vmatpush.xpose.msra.mxu0 %v304
    %367 = vmatmul.f32.gmra.mxu0 %v301
    %v368 = vpop.f32.mrf.mxu0
    %v369 = vadd.f32 0.0, %v368
    %370 = vdwg.mxu0
    %371 = vset.pattern.permute.xlu0 32
    %372 = vperm.xlu0 %371, %v260
    %v373 = vpop.permute.xlu0 %372
    %375 = vset.pattern.permute.xlu0 32
    %376 = vperm.xlu0 %375, %v262
    %v377 = vpop.permute.xlu0 %376
    %379 = vset.pattern.permute.xlu0 32
    %380 = vperm.xlu0 %379, %v265
    %v381 = vpop.permute.xlu0 %380
    %383 = vset.pattern.permute.xlu0 32
    %384 = vperm.xlu0 %383, %v267
    %v385 = vpop.permute.xlu0 %384
    %387 = vset.pattern.permute.xlu0 32
    %388 = vperm.xlu0 %387, %v270
    %v389 = vpop.permute.xlu0 %388
    %391 = vset.pattern.permute.xlu0 32
    %392 = vperm.xlu0 %391, %v272
    %v393 = vpop.permute.xlu0 %392
    %395 = vset.pattern.permute.xlu0 32
    %396 = vperm.xlu0 %395, %v275
    %v397 = vpop.permute.xlu0 %396
    %399 = vset.pattern.permute.xlu0 32
    %400 = vperm.xlu0 %399, %v277
    %v401 = vpop.permute.xlu0 %400
    %403 = vset.pattern.permute.xlu0 32
    %404 = vperm.xlu0 %403, %v280
    %v405 = vpop.permute.xlu0 %404
    %407 = vset.pattern.permute.xlu0 32
    %408 = vperm.xlu0 %407, %v282
    %v409 = vpop.permute.xlu0 %408
    %411 = vset.pattern.permute.xlu0 32
    %412 = vperm.xlu0 %411, %v285
    %v413 = vpop.permute.xlu0 %412
    %415 = vset.pattern.permute.xlu0 32
    %416 = vperm.xlu0 %415, %v287
    %v417 = vpop.permute.xlu0 %416
    %419 = vset.pattern.permute.xlu0 32
    %420 = vperm.xlu0 %419, %v290
    %v421 = vpop.permute.xlu0 %420
    %423 = vset.pattern.permute.xlu0 32
    %424 = vperm.xlu0 %423, %v292
    %v425 = vpop.permute.xlu0 %424
    %427 = vset.pattern.permute.xlu0 32
    %428 = vperm.xlu0 %427, %v295
    %v429 = vpop.permute.xlu0 %428
    %431 = vset.pattern.permute.xlu0 32
    %432 = vperm.xlu0 %431, %v297
    %v433 = vpop.permute.xlu0 %432
    %v435 = vperm.slane %v369, 0
    %v436 = vadd.f32 %v373, %v435
    %v437 = vadd.f32 %v377, %v435
    %v438 = vadd.f32 %v381, %v435
    %v439 = vadd.f32 %v385, %v435
    %v440 = vadd.f32 %v389, %v435
    %v441 = vadd.f32 %v393, %v435
    %v442 = vadd.f32 %v397, %v435
    %v443 = vadd.f32 %v401, %v435
    %v444 = vadd.f32 %v405, %v435
    %v445 = vadd.f32 %v409, %v435
    %v446 = vadd.f32 %v413, %v435
    %v447 = vadd.f32 %v417, %v435
    %v448 = vadd.f32 %v421, %v435
    %v449 = vadd.f32 %v425, %v435
    %v450 = vadd.f32 %v429, %v435
    %v451 = vadd.f32 %v433, %v435
    %v452 = vmul.f32 %v436, %v188
    %v453 = vmul.f32 %v437, %v189
    %v454 = vmul.f32 %v438, %v190
    %v455 = vmul.f32 %v439, %v191
    %v456 = vmul.f32 %v440, %v192
    %v457 = vmul.f32 %v441, %v193
    %v458 = vmul.f32 %v442, %v194
    %v459 = vmul.f32 %v443, %v195
    %v460 = vmul.f32 %v444, %v196
    %v461 = vmul.f32 %v445, %v197
    %v462 = vmul.f32 %v446, %v198
    %v463 = vmul.f32 %v447, %v199
    %v464 = vmul.f32 %v448, %v200
    %v465 = vmul.f32 %v449, %v201
    %v466 = vmul.f32 %v450, %v202
    %v467 = vmul.f32 %v451, %v203
    %vm468 = vcmp.gt.f32.partialorder %v452, 0.0
    %vm469 = vcmp.gt.f32.partialorder %v453, 0.0
    %vm470 = vcmp.gt.f32.partialorder %v454, 0.0
    %vm471 = vcmp.gt.f32.partialorder %v455, 0.0
    %vm472 = vcmp.gt.f32.partialorder %v456, 0.0
    %vm473 = vcmp.gt.f32.partialorder %v457, 0.0
    %vm474 = vcmp.gt.f32.partialorder %v458, 0.0
    %vm475 = vcmp.gt.f32.partialorder %v459, 0.0
    %vm476 = vcmp.gt.f32.partialorder %v460, 0.0
    %vm477 = vcmp.gt.f32.partialorder %v461, 0.0
    %vm478 = vcmp.gt.f32.partialorder %v462, 0.0
    %vm479 = vcmp.gt.f32.partialorder %v463, 0.0
    %vm480 = vcmp.gt.f32.partialorder %v464, 0.0
    %vm481 = vcmp.gt.f32.partialorder %v465, 0.0
    %vm482 = vcmp.gt.f32.partialorder %v466, 0.0
    %vm483 = vcmp.gt.f32.partialorder %v467, 0.0
    %v484 = vmul.f32 %v452, 0.2
    %v485 = vmul.f32 %v453, 0.2
    %v486 = vmul.f32 %v454, 0.2
    %v487 = vmul.f32 %v455, 0.2
    %v488 = vmul.f32 %v456, 0.2
    %v489 = vmul.f32 %v457, 0.2
    %v490 = vmul.f32 %v458, 0.2
    %v491 = vmul.f32 %v459, 0.2
    %v492 = vmul.f32 %v460, 0.2
    %v493 = vmul.f32 %v461, 0.2
    %v494 = vmul.f32 %v462, 0.2
    %v495 = vmul.f32 %v463, 0.2
    %v496 = vmul.f32 %v464, 0.2
    %v497 = vmul.f32 %v465, 0.2
    %v498 = vmul.f32 %v466, 0.2
    %v499 = vmul.f32 %v467, 0.2
    %v500 = vsel %vm468, %v452, %v484
    %v501 = vsel %vm469, %v453, %v485
    %v502 = vsel %vm470, %v454, %v486
    %v503 = vsel %vm471, %v455, %v487
    %v504 = vsel %vm472, %v456, %v488
    %v505 = vsel %vm473, %v457, %v489
    %v506 = vsel %vm474, %v458, %v490
    %v507 = vsel %vm475, %v459, %v491
    %v508 = vsel %vm476, %v460, %v492
    %v509 = vsel %vm477, %v461, %v493
    %v510 = vsel %vm478, %v462, %v494
    %v511 = vsel %vm479, %v463, %v495
    %v512 = vsel %vm480, %v464, %v496
    %v513 = vsel %vm481, %v465, %v497
    %v514 = vsel %vm482, %v466, %v498
    %v515 = vsel %vm483, %v467, %v499
    %vm516 = vcmp.gt.f32.partialorder %v47, 0.0
    %vm517 = vcmp.gt.f32.partialorder %v48, 0.0
    %vm518 = vcmp.gt.f32.partialorder %v49, 0.0
    %vm519 = vcmp.gt.f32.partialorder %v50, 0.0
    %vm520 = vcmp.gt.f32.partialorder %v51, 0.0
    %vm521 = vcmp.gt.f32.partialorder %v52, 0.0
    %vm522 = vcmp.gt.f32.partialorder %v53, 0.0
    %vm523 = vcmp.gt.f32.partialorder %v54, 0.0
    %vm524 = vcmp.gt.f32.partialorder %v55, 0.0
    %vm525 = vcmp.gt.f32.partialorder %v56, 0.0
    %vm526 = vcmp.gt.f32.partialorder %v57, 0.0
    %vm527 = vcmp.gt.f32.partialorder %v58, 0.0
    %vm528 = vcmp.gt.f32.partialorder %v59, 0.0
    %vm529 = vcmp.gt.f32.partialorder %v60, 0.0
    %vm530 = vcmp.gt.f32.partialorder %v61, 0.0
    %vm531 = vcmp.gt.f32.partialorder %v62, 0.0
    %v532 = vsel %vm516, %v500, -9e+15
    %v533 = vsel %vm517, %v501, -9e+15
    %v534 = vsel %vm518, %v502, -9e+15
    %v535 = vsel %vm519, %v503, -9e+15
    %v536 = vsel %vm520, %v504, -9e+15
    %v537 = vsel %vm521, %v505, -9e+15
    %v538 = vsel %vm522, %v506, -9e+15
    %v539 = vsel %vm523, %v507, -9e+15
    %v540 = vsel %vm524, %v508, -9e+15
    %v541 = vsel %vm525, %v509, -9e+15
    %v542 = vsel %vm526, %v510, -9e+15
    %v543 = vsel %vm527, %v511, -9e+15
    %v544 = vsel %vm528, %v512, -9e+15
    %v545 = vsel %vm529, %v513, -9e+15
    %v546 = vsel %vm530, %v514, -9e+15
    %v547 = vsel %vm531, %v515, -9e+15
    %548 = vmax.xlane.f32.xlu0 %v532
    %v549 = vpop.xlane.xlu0 %548
    %550 = vmax.xlane.f32.xlu0 %v533
    %v551 = vpop.xlane.xlu0 %550
    %552 = vmax.xlane.f32.xlu0 %v534
    %v553 = vpop.xlane.xlu0 %552
    %554 = vmax.xlane.f32.xlu0 %v535
    %v555 = vpop.xlane.xlu0 %554
    %556 = vmax.xlane.f32.xlu0 %v536
    %v557 = vpop.xlane.xlu0 %556
    %558 = vmax.xlane.f32.xlu0 %v537
    %v559 = vpop.xlane.xlu0 %558
    %560 = vmax.xlane.f32.xlu0 %v538
    %v561 = vpop.xlane.xlu0 %560
    %562 = vmax.xlane.f32.xlu0 %v539
    %v563 = vpop.xlane.xlu0 %562
    %564 = vmax.xlane.f32.xlu0 %v540
    %v565 = vpop.xlane.xlu0 %564
    %566 = vmax.xlane.f32.xlu0 %v541
    %v567 = vpop.xlane.xlu0 %566
    %568 = vmax.xlane.f32.xlu0 %v542
    %v569 = vpop.xlane.xlu0 %568
    %570 = vmax.xlane.f32.xlu0 %v543
    %v571 = vpop.xlane.xlu0 %570
    %572 = vmax.xlane.f32.xlu0 %v544
    %v573 = vpop.xlane.xlu0 %572
    %574 = vmax.xlane.f32.xlu0 %v545
    %v575 = vpop.xlane.xlu0 %574
    %576 = vmax.xlane.f32.xlu0 %v546
    %v577 = vpop.xlane.xlu0 %576
    %578 = vmax.xlane.f32.xlu0 %v547
    %v579 = vpop.xlane.xlu0 %578
    %v580 = vsub.f32 %v532, %v549
    %v581 = vsub.f32 %v533, %v551
    %v582 = vsub.f32 %v534, %v553
    %v583 = vsub.f32 %v535, %v555
    %v584 = vsub.f32 %v536, %v557
    %v585 = vsub.f32 %v537, %v559
    %v586 = vsub.f32 %v538, %v561
    %v587 = vsub.f32 %v539, %v563
    %v588 = vsub.f32 %v540, %v565
    %v589 = vsub.f32 %v541, %v567
    %v590 = vsub.f32 %v542, %v569
    %v591 = vsub.f32 %v543, %v571
    %v592 = vsub.f32 %v544, %v573
    %v593 = vsub.f32 %v545, %v575
    %v594 = vsub.f32 %v546, %v577
    %v595 = vsub.f32 %v547, %v579
    %v596 = vmul.f32 %v580, 1.442695
    %v597 = vpow.pop %v596
    %v598 = vmul.f32 %v581, 1.442695
    %v599 = vpow.pop %v598
    %v600 = vmul.f32 %v582, 1.442695
    %v601 = vpow.pop %v600
    %v602 = vmul.f32 %v583, 1.442695
    %v603 = vpow.pop %v602
    %v604 = vmul.f32 %v584, 1.442695
    %v605 = vpow.pop %v604
    %v606 = vmul.f32 %v585, 1.442695
    %v607 = vpow.pop %v606
    %v608 = vmul.f32 %v586, 1.442695
    %v609 = vpow.pop %v608
    %v610 = vmul.f32 %v587, 1.442695
    %v611 = vpow.pop %v610
    %v612 = vmul.f32 %v588, 1.442695
    %v613 = vpow.pop %v612
    %v614 = vmul.f32 %v589, 1.442695
    %v615 = vpow.pop %v614
    %v616 = vmul.f32 %v590, 1.442695
    %v617 = vpow.pop %v616
    %v618 = vmul.f32 %v591, 1.442695
    %v619 = vpow.pop %v618
    %v620 = vmul.f32 %v592, 1.442695
    %v621 = vpow.pop %v620
    %v622 = vmul.f32 %v593, 1.442695
    %v623 = vpow.pop %v622
    %v624 = vmul.f32 %v594, 1.442695
    %v625 = vpow.pop %v624
    %v626 = vmul.f32 %v595, 1.442695
    %v627 = vpow.pop %v626
    %628 = vadd.xlane.f32.xlu0 %v597
    %v629 = vpop.xlane.xlu0 %628
    %630 = vadd.xlane.f32.xlu0 %v599
    %v631 = vpop.xlane.xlu0 %630
    %632 = vadd.xlane.f32.xlu0 %v601
    %v633 = vpop.xlane.xlu0 %632
    %634 = vadd.xlane.f32.xlu0 %v603
    %v635 = vpop.xlane.xlu0 %634
    %636 = vadd.xlane.f32.xlu0 %v605
    %v637 = vpop.xlane.xlu0 %636
    %638 = vadd.xlane.f32.xlu0 %v607
    %v639 = vpop.xlane.xlu0 %638
    %640 = vadd.xlane.f32.xlu0 %v609
    %v641 = vpop.xlane.xlu0 %640
    %642 = vadd.xlane.f32.xlu0 %v611
    %v643 = vpop.xlane.xlu0 %642
    %644 = vadd.xlane.f32.xlu0 %v613
    %v645 = vpop.xlane.xlu0 %644
    %646 = vadd.xlane.f32.xlu0 %v615
    %v647 = vpop.xlane.xlu0 %646
    %648 = vadd.xlane.f32.xlu0 %v617
    %v649 = vpop.xlane.xlu0 %648
    %650 = vadd.xlane.f32.xlu0 %v619
    %v651 = vpop.xlane.xlu0 %650
    %652 = vadd.xlane.f32.xlu0 %v621
    %v653 = vpop.xlane.xlu0 %652
    %654 = vadd.xlane.f32.xlu0 %v623
    %v655 = vpop.xlane.xlu0 %654
    %656 = vadd.xlane.f32.xlu0 %v625
    %v657 = vpop.xlane.xlu0 %656
    %658 = vadd.xlane.f32.xlu0 %v627
    %v659 = vpop.xlane.xlu0 %658
    %v660 = vpack.c.bf16 %v599, %v597
    %v661 = vpack.c.bf16 %v603, %v601
    %v662 = vpack.c.bf16 %v607, %v605
    %v663 = vpack.c.bf16 %v611, %v609
    %v664 = vpack.c.bf16 %v615, %v613
    %v665 = vpack.c.bf16 %v619, %v617
    %v666 = vpack.c.bf16 %v623, %v621
    %v667 = vpack.c.bf16 %v627, %v625
    %v668 = vpack.c.bf16 %v262, %v260
    %v669 = vpack.c.bf16 %v267, %v265
    %v670 = vpack.c.bf16 %v272, %v270
    %v671 = vpack.c.bf16 %v277, %v275
    %v672 = vpack.c.bf16 %v282, %v280
    %v673 = vpack.c.bf16 %v287, %v285
    %v674 = vpack.c.bf16 %v292, %v290
    %v675 = vpack.c.bf16 %v297, %v295
    %676 = vmatpush.bf16.msra.mxu0 %v675
    %677 = vmatpush.bf16.msra.mxu0 %v674
    %678 = vmatpush.bf16.msra.mxu0 %v673
    %679 = vmatpush.bf16.msra.mxu0 %v672
    %680 = vmatpush.bf16.msra.mxu0 %v671
    %681 = vmatpush.bf16.msra.mxu0 %v670
    %682 = vmatpush.bf16.msra.mxu0 %v669
    %683 = vmatpush.bf16.msra.mxu0 %v668
    %684 = vmatmul.bf16.gmra.mxu0 %v660
    %v685 = vpop.f32.mrf.mxu0
    %v686 = vadd.f32 0.0, %v685
    %v687 = vpop.f32.mrf.mxu0
    %v688 = vadd.f32 0.0, %v687
    %689 = vmatmul.bf16.gmra.mxu0 %v661
    %v690 = vpop.f32.mrf.mxu0
    %v691 = vadd.f32 0.0, %v690
    %v692 = vpop.f32.mrf.mxu0
    %v693 = vadd.f32 0.0, %v692
    %694 = vmatmul.bf16.gmra.mxu0 %v662
    %v695 = vpop.f32.mrf.mxu0
    %v696 = vadd.f32 0.0, %v695
    %v697 = vpop.f32.mrf.mxu0
    %v698 = vadd.f32 0.0, %v697
    %699 = vmatmul.bf16.gmra.mxu0 %v663
    %v700 = vpop.f32.mrf.mxu0
    %v701 = vadd.f32 0.0, %v700
    %v702 = vpop.f32.mrf.mxu0
    %v703 = vadd.f32 0.0, %v702
    %704 = vmatmul.bf16.gmra.mxu0 %v664
    %v705 = vpop.f32.mrf.mxu0
    %v706 = vadd.f32 0.0, %v705
    %v707 = vpop.f32.mrf.mxu0
    %v708 = vadd.f32 0.0, %v707
    %709 = vmatmul.bf16.gmra.mxu0 %v665
    %v710 = vpop.f32.mrf.mxu0
    %v711 = vadd.f32 0.0, %v710
    %v712 = vpop.f32.mrf.mxu0
    %v713 = vadd.f32 0.0, %v712
    %714 = vmatmul.bf16.gmra.mxu0 %v666
    %v715 = vpop.f32.mrf.mxu0
    %v716 = vadd.f32 0.0, %v715
    %v717 = vpop.f32.mrf.mxu0
    %v718 = vadd.f32 0.0, %v717
    %719 = vmatmul.bf16.gmra.mxu0 %v667
    %v720 = vpop.f32.mrf.mxu0
    %v721 = vadd.f32 0.0, %v720
    %v722 = vpop.f32.mrf.mxu0
    %v723 = vadd.f32 0.0, %v722
    %724 = vdwg.mxu0
    %v725 = vrcp.pop %v629
    %v726 = vrcp.pop %v631
    %v727 = vrcp.pop %v633
    %v728 = vrcp.pop %v635
    %v729 = vrcp.pop %v637
    %v730 = vrcp.pop %v639
    %v731 = vrcp.pop %v641
    %v732 = vrcp.pop %v643
    %v733 = vrcp.pop %v645
    %v734 = vrcp.pop %v647
    %v735 = vrcp.pop %v649
    %v736 = vrcp.pop %v651
    %v737 = vrcp.pop %v653
    %v738 = vrcp.pop %v655
    %v739 = vrcp.pop %v657
    %v740 = vrcp.pop %v659
    %v741 = vmul.f32 %v686, %v725
    %v742 = vmul.f32 %v688, %v726
    %v743 = vmul.f32 %v691, %v727
    %v744 = vmul.f32 %v693, %v728
    %v745 = vmul.f32 %v696, %v729
    %v746 = vmul.f32 %v698, %v730
    %v747 = vmul.f32 %v701, %v731
    %v748 = vmul.f32 %v703, %v732
    %v749 = vmul.f32 %v706, %v733
    %v750 = vmul.f32 %v708, %v734
    %v751 = vmul.f32 %v711, %v735
    %v752 = vmul.f32 %v713, %v736
    %v753 = vmul.f32 %v716, %v737
    %v754 = vmul.f32 %v718, %v738
    %v755 = vmul.f32 %v721, %v739
    %v756 = vmul.f32 %v723, %v740
    %vm757 = vcmp.gt.f32.partialorder %v741, 0.0
    %vm758 = vcmp.gt.f32.partialorder %v742, 0.0
    %vm759 = vcmp.gt.f32.partialorder %v743, 0.0
    %vm760 = vcmp.gt.f32.partialorder %v744, 0.0
    %vm761 = vcmp.gt.f32.partialorder %v745, 0.0
    %vm762 = vcmp.gt.f32.partialorder %v746, 0.0
    %vm763 = vcmp.gt.f32.partialorder %v747, 0.0
    %vm764 = vcmp.gt.f32.partialorder %v748, 0.0
    %vm765 = vcmp.gt.f32.partialorder %v749, 0.0
    %vm766 = vcmp.gt.f32.partialorder %v750, 0.0
    %vm767 = vcmp.gt.f32.partialorder %v751, 0.0
    %vm768 = vcmp.gt.f32.partialorder %v752, 0.0
    %vm769 = vcmp.gt.f32.partialorder %v753, 0.0
    %vm770 = vcmp.gt.f32.partialorder %v754, 0.0
    %vm771 = vcmp.gt.f32.partialorder %v755, 0.0
    %vm772 = vcmp.gt.f32.partialorder %v756, 0.0
    %v773 = vmin.f32 %v741, 0.0
    %v774 = vmin.f32 %v742, 0.0
    %v775 = vmin.f32 %v743, 0.0
    %v776 = vmin.f32 %v744, 0.0
    %v777 = vmin.f32 %v745, 0.0
    %v778 = vmin.f32 %v746, 0.0
    %v779 = vmin.f32 %v747, 0.0
    %v780 = vmin.f32 %v748, 0.0
    %v781 = vmin.f32 %v749, 0.0
    %v782 = vmin.f32 %v750, 0.0
    %v783 = vmin.f32 %v751, 0.0
    %v784 = vmin.f32 %v752, 0.0
    %v785 = vmin.f32 %v753, 0.0
    %v786 = vmin.f32 %v754, 0.0
    %v787 = vmin.f32 %v755, 0.0
    %v788 = vmin.f32 %v756, 0.0
    %v789 = vmul.f32 %v773, 1.442695
    %v790 = vpow.pop %v789
    %v791 = vmul.f32 %v774, 1.442695
    %v792 = vpow.pop %v791
    %v793 = vmul.f32 %v775, 1.442695
    %v794 = vpow.pop %v793
    %v795 = vmul.f32 %v776, 1.442695
    %v796 = vpow.pop %v795
    %v797 = vmul.f32 %v777, 1.442695
    %v798 = vpow.pop %v797
    %v799 = vmul.f32 %v778, 1.442695
    %v800 = vpow.pop %v799
    %v801 = vmul.f32 %v779, 1.442695
    %v802 = vpow.pop %v801
    %v803 = vmul.f32 %v780, 1.442695
    %v804 = vpow.pop %v803
    %v805 = vmul.f32 %v781, 1.442695
    %v806 = vpow.pop %v805
    %v807 = vmul.f32 %v782, 1.442695
    %v808 = vpow.pop %v807
    %v809 = vmul.f32 %v783, 1.442695
    %v810 = vpow.pop %v809
    %v811 = vmul.f32 %v784, 1.442695
    %v812 = vpow.pop %v811
    %v813 = vmul.f32 %v785, 1.442695
    %v814 = vpow.pop %v813
    %v815 = vmul.f32 %v786, 1.442695
    %v816 = vpow.pop %v815
    %v817 = vmul.f32 %v787, 1.442695
    %v818 = vpow.pop %v817
    %v819 = vmul.f32 %v788, 1.442695
    %v820 = vpow.pop %v819
    %v821 = vsub.f32 %v790, 1.0
    %v822 = vsub.f32 %v792, 1.0
    %v823 = vsub.f32 %v794, 1.0
    %v824 = vsub.f32 %v796, 1.0
    %v825 = vsub.f32 %v798, 1.0
    %v826 = vsub.f32 %v800, 1.0
    %v827 = vsub.f32 %v802, 1.0
    %v828 = vsub.f32 %v804, 1.0
    %v829 = vsub.f32 %v806, 1.0
    %v830 = vsub.f32 %v808, 1.0
    %v831 = vsub.f32 %v810, 1.0
    %v832 = vsub.f32 %v812, 1.0
    %v833 = vsub.f32 %v814, 1.0
    %v834 = vsub.f32 %v816, 1.0
    %v835 = vsub.f32 %v818, 1.0
    %v836 = vsub.f32 %v820, 1.0
    %v837 = vsel %vm757, %v741, %v821
    %v838 = vsel %vm758, %v742, %v822
    %v839 = vsel %vm759, %v743, %v823
    %v840 = vsel %vm760, %v744, %v824
    %v841 = vsel %vm761, %v745, %v825
    %v842 = vsel %vm762, %v746, %v826
    %v843 = vsel %vm763, %v747, %v827
    %v844 = vsel %vm764, %v748, %v828
    %v845 = vsel %vm765, %v749, %v829
    %v846 = vsel %vm766, %v750, %v830
    %v847 = vsel %vm767, %v751, %v831
    %v848 = vsel %vm768, %v752, %v832
    %v849 = vsel %vm769, %v753, %v833
    %v850 = vsel %vm770, %v754, %v834
    %v851 = vsel %vm771, %v755, %v835
    %v852 = vsel %vm772, %v756, %v836
    %v853 = vld [vmem:[%s4] sm:$0xff]
    %v854 = vld [vmem:[%s4 + $0x8] sm:$0xff]
    %v855 = vld [vmem:[%s4 + $0x10] sm:$0xff]
    %v856 = vld [vmem:[%s4 + $0x18] sm:$0xff]
    %v857 = vld [vmem:[%s5] sm:$0x1]
    %v858 = vpack.c.bf16 %v838, %v837
    %v859 = vpack.c.bf16 %v840, %v839
    %v860 = vpack.c.bf16 %v842, %v841
    %v861 = vpack.c.bf16 %v844, %v843
    %v862 = vpack.c.bf16 %v846, %v845
    %v863 = vpack.c.bf16 %v848, %v847
    %v864 = vpack.c.bf16 %v850, %v849
    %v865 = vpack.c.bf16 %v852, %v851
    %v866 = vpack.c.bf16 %v854, %v853
    %v867 = vpack.c.bf16 %v856, %v855
    %v869 = vsel %vm299, %v858, 0
    %v872 = vsel %vm299, %v859, 0
    %v875 = vsel %vm299, %v860, 0
    %v878 = vsel %vm299, %v861, 0
    %v881 = vsel %vm299, %v862, 0
    %v884 = vsel %vm299, %v863, 0
    %v887 = vsel %vm299, %v864, 0
    %v890 = vsel %vm299, %v865, 0
    %892 = vmatpush.bf16.msra.mxu0 0
    %893 = vmatpush.bf16.msra.mxu0 0
    %894 = vmatpush.bf16.msra.mxu0 0
    %895 = vmatpush.bf16.msra.mxu0 0
    %896 = vmatpush.bf16.msra.mxu0 0
    %897 = vmatpush.bf16.msra.mxu0 0
    %898 = vmatpush.bf16.msra.mxu0 %v867
    %899 = vmatpush.bf16.msra.mxu0 %v866
    %900 = vmatmul.bf16.gmra.mxu0 %v869
    %v901 = vpop.f32.mrf.mxu0
    %v902 = vadd.f32 0.0, %v901
    %v903 = vpop.f32.mrf.mxu0
    %v904 = vadd.f32 0.0, %v903
    %905 = vmatmul.bf16.gmra.mxu0 %v872
    %v906 = vpop.f32.mrf.mxu0
    %v907 = vadd.f32 0.0, %v906
    %v908 = vpop.f32.mrf.mxu0
    %v909 = vadd.f32 0.0, %v908
    %910 = vmatmul.bf16.gmra.mxu0 %v875
    %v911 = vpop.f32.mrf.mxu0
    %v912 = vadd.f32 0.0, %v911
    %v913 = vpop.f32.mrf.mxu0
    %v914 = vadd.f32 0.0, %v913
    %915 = vmatmul.bf16.gmra.mxu0 %v878
    %v916 = vpop.f32.mrf.mxu0
    %v917 = vadd.f32 0.0, %v916
    %v918 = vpop.f32.mrf.mxu0
    %v919 = vadd.f32 0.0, %v918
    %920 = vmatmul.bf16.gmra.mxu0 %v881
    %v921 = vpop.f32.mrf.mxu0
    %v922 = vadd.f32 0.0, %v921
    %v923 = vpop.f32.mrf.mxu0
    %v924 = vadd.f32 0.0, %v923
    %925 = vmatmul.bf16.gmra.mxu0 %v884
    %v926 = vpop.f32.mrf.mxu0
    %v927 = vadd.f32 0.0, %v926
    %v928 = vpop.f32.mrf.mxu0
    %v929 = vadd.f32 0.0, %v928
    %930 = vmatmul.bf16.gmra.mxu0 %v887
    %v931 = vpop.f32.mrf.mxu0
    %v932 = vadd.f32 0.0, %v931
    %v933 = vpop.f32.mrf.mxu0
    %v934 = vadd.f32 0.0, %v933
    %935 = vmatmul.bf16.gmra.mxu0 %v890
    %v936 = vpop.f32.mrf.mxu0
    %v937 = vadd.f32 0.0, %v936
    %v938 = vpop.f32.mrf.mxu0
    %v939 = vadd.f32 0.0, %v938
    %940 = vdwg.mxu0
    %vm941 = vcmask 130048
    %v943 = vsel %vm941, %v857, 0
    %v946 = vsel %vm941, %v902, 0
    %v949 = vsel %vm941, %v904, 0
    %v952 = vsel %vm941, %v907, 0
    %v955 = vsel %vm941, %v909, 0
    %v958 = vsel %vm941, %v912, 0
    %v961 = vsel %vm941, %v914, 0
    %v964 = vsel %vm941, %v917, 0
    %v967 = vsel %vm941, %v919, 0
    %v970 = vsel %vm941, %v922, 0
    %v973 = vsel %vm941, %v924, 0
    %v976 = vsel %vm941, %v927, 0
    %v979 = vsel %vm941, %v929, 0
    %v982 = vsel %vm941, %v932, 0
    %v985 = vsel %vm941, %v934, 0
    %v988 = vsel %vm941, %v937, 0
    %v991 = vsel %vm941, %v939, 0
    %993 = vmatpush.xpose.msra.mxu0 %v991
    %994 = vmatpush.xpose.msra.mxu0 %v988
    %995 = vmatpush.xpose.msra.mxu0 %v985
    %996 = vmatpush.xpose.msra.mxu0 %v982
    %997 = vmatpush.xpose.msra.mxu0 %v979
    %998 = vmatpush.xpose.msra.mxu0 %v976
    %999 = vmatpush.xpose.msra.mxu0 %v973
    %1000 = vmatpush.xpose.msra.mxu0 %v970
    %1001 = vmatpush.xpose.msra.mxu0 %v967
    %1002 = vmatpush.xpose.msra.mxu0 %v964
    %1003 = vmatpush.xpose.msra.mxu0 %v961
    %1004 = vmatpush.xpose.msra.mxu0 %v958
    %1005 = vmatpush.xpose.msra.mxu0 %v955
    %1006 = vmatpush.xpose.msra.mxu0 %v952
    %1007 = vmatpush.xpose.msra.mxu0 %v949
    %1008 = vmatpush.xpose.msra.mxu0 %v946
    %1009 = vmatmul.f32.gmra.mxu0 %v943
    %v1010 = vpop.f32.mrf.mxu0
    %v1011 = vadd.f32 0.0, %v1010
    %1012 = vdwg.mxu0
    %1013 = vset.pattern.permute.xlu0 16
    %1014 = vperm.xlu0 %1013, %v902
    %v1015 = vpop.permute.xlu0 %1014
    %1017 = vset.pattern.permute.xlu0 16
    %1018 = vperm.xlu0 %1017, %v904
    %v1019 = vpop.permute.xlu0 %1018
    %1021 = vset.pattern.permute.xlu0 16
    %1022 = vperm.xlu0 %1021, %v907
    %v1023 = vpop.permute.xlu0 %1022
    %1025 = vset.pattern.permute.xlu0 16
    %1026 = vperm.xlu0 %1025, %v909
    %v1027 = vpop.permute.xlu0 %1026
    %1029 = vset.pattern.permute.xlu0 16
    %1030 = vperm.xlu0 %1029, %v912
    %v1031 = vpop.permute.xlu0 %1030
    %1033 = vset.pattern.permute.xlu0 16
    %1034 = vperm.xlu0 %1033, %v914
    %v1035 = vpop.permute.xlu0 %1034
    %1037 = vset.pattern.permute.xlu0 16
    %1038 = vperm.xlu0 %1037, %v917
    %v1039 = vpop.permute.xlu0 %1038
    %1041 = vset.pattern.permute.xlu0 16
    %1042 = vperm.xlu0 %1041, %v919
    %v1043 = vpop.permute.xlu0 %1042
    %1045 = vset.pattern.permute.xlu0 16
    %1046 = vperm.xlu0 %1045, %v922
    %v1047 = vpop.permute.xlu0 %1046
    %1049 = vset.pattern.permute.xlu0 16
    %1050 = vperm.xlu0 %1049, %v924
    %v1051 = vpop.permute.xlu0 %1050
    %1053 = vset.pattern.permute.xlu0 16
    %1054 = vperm.xlu0 %1053, %v927
    %v1055 = vpop.permute.xlu0 %1054
    %1057 = vset.pattern.permute.xlu0 16
    %1058 = vperm.xlu0 %1057, %v929
    %v1059 = vpop.permute.xlu0 %1058
    %1061 = vset.pattern.permute.xlu0 16
    %1062 = vperm.xlu0 %1061, %v932
    %v1063 = vpop.permute.xlu0 %1062
    %1065 = vset.pattern.permute.xlu0 16
    %1066 = vperm.xlu0 %1065, %v934
    %v1067 = vpop.permute.xlu0 %1066
    %1069 = vset.pattern.permute.xlu0 16
    %1070 = vperm.xlu0 %1069, %v937
    %v1071 = vpop.permute.xlu0 %1070
    %1073 = vset.pattern.permute.xlu0 16
    %1074 = vperm.xlu0 %1073, %v939
    %v1075 = vpop.permute.xlu0 %1074
    %v1077 = vperm.slane %v1011, 0
    %v1078 = vadd.f32 %v1015, %v1077
    %v1079 = vadd.f32 %v1019, %v1077
    %v1080 = vadd.f32 %v1023, %v1077
    %v1081 = vadd.f32 %v1027, %v1077
    %v1082 = vadd.f32 %v1031, %v1077
    %v1083 = vadd.f32 %v1035, %v1077
    %v1084 = vadd.f32 %v1039, %v1077
    %v1085 = vadd.f32 %v1043, %v1077
    %v1086 = vadd.f32 %v1047, %v1077
    %v1087 = vadd.f32 %v1051, %v1077
    %v1088 = vadd.f32 %v1055, %v1077
    %v1089 = vadd.f32 %v1059, %v1077
    %v1090 = vadd.f32 %v1063, %v1077
    %v1091 = vadd.f32 %v1067, %v1077
    %v1092 = vadd.f32 %v1071, %v1077
    %v1093 = vadd.f32 %v1075, %v1077
    %v1094 = vmul.f32 %v1078, %v188
    %v1095 = vmul.f32 %v1079, %v189
    %v1096 = vmul.f32 %v1080, %v190
    %v1097 = vmul.f32 %v1081, %v191
    %v1098 = vmul.f32 %v1082, %v192
    %v1099 = vmul.f32 %v1083, %v193
    %v1100 = vmul.f32 %v1084, %v194
    %v1101 = vmul.f32 %v1085, %v195
    %v1102 = vmul.f32 %v1086, %v196
    %v1103 = vmul.f32 %v1087, %v197
    %v1104 = vmul.f32 %v1088, %v198
    %v1105 = vmul.f32 %v1089, %v199
    %v1106 = vmul.f32 %v1090, %v200
    %v1107 = vmul.f32 %v1091, %v201
    %v1108 = vmul.f32 %v1092, %v202
    %v1109 = vmul.f32 %v1093, %v203
    %vm1110 = vcmp.gt.f32.partialorder %v1094, 0.0
    %vm1111 = vcmp.gt.f32.partialorder %v1095, 0.0
    %vm1112 = vcmp.gt.f32.partialorder %v1096, 0.0
    %vm1113 = vcmp.gt.f32.partialorder %v1097, 0.0
    %vm1114 = vcmp.gt.f32.partialorder %v1098, 0.0
    %vm1115 = vcmp.gt.f32.partialorder %v1099, 0.0
    %vm1116 = vcmp.gt.f32.partialorder %v1100, 0.0
    %vm1117 = vcmp.gt.f32.partialorder %v1101, 0.0
    %vm1118 = vcmp.gt.f32.partialorder %v1102, 0.0
    %vm1119 = vcmp.gt.f32.partialorder %v1103, 0.0
    %vm1120 = vcmp.gt.f32.partialorder %v1104, 0.0
    %vm1121 = vcmp.gt.f32.partialorder %v1105, 0.0
    %vm1122 = vcmp.gt.f32.partialorder %v1106, 0.0
    %vm1123 = vcmp.gt.f32.partialorder %v1107, 0.0
    %vm1124 = vcmp.gt.f32.partialorder %v1108, 0.0
    %vm1125 = vcmp.gt.f32.partialorder %v1109, 0.0
    %v1126 = vmul.f32 %v1094, 0.2
    %v1127 = vmul.f32 %v1095, 0.2
    %v1128 = vmul.f32 %v1096, 0.2
    %v1129 = vmul.f32 %v1097, 0.2
    %v1130 = vmul.f32 %v1098, 0.2
    %v1131 = vmul.f32 %v1099, 0.2
    %v1132 = vmul.f32 %v1100, 0.2
    %v1133 = vmul.f32 %v1101, 0.2
    %v1134 = vmul.f32 %v1102, 0.2
    %v1135 = vmul.f32 %v1103, 0.2
    %v1136 = vmul.f32 %v1104, 0.2
    %v1137 = vmul.f32 %v1105, 0.2
    %v1138 = vmul.f32 %v1106, 0.2
    %v1139 = vmul.f32 %v1107, 0.2
    %v1140 = vmul.f32 %v1108, 0.2
    %v1141 = vmul.f32 %v1109, 0.2
    %v1142 = vsel %vm1110, %v1094, %v1126
    %v1143 = vsel %vm1111, %v1095, %v1127
    %v1144 = vsel %vm1112, %v1096, %v1128
    %v1145 = vsel %vm1113, %v1097, %v1129
    %v1146 = vsel %vm1114, %v1098, %v1130
    %v1147 = vsel %vm1115, %v1099, %v1131
    %v1148 = vsel %vm1116, %v1100, %v1132
    %v1149 = vsel %vm1117, %v1101, %v1133
    %v1150 = vsel %vm1118, %v1102, %v1134
    %v1151 = vsel %vm1119, %v1103, %v1135
    %v1152 = vsel %vm1120, %v1104, %v1136
    %v1153 = vsel %vm1121, %v1105, %v1137
    %v1154 = vsel %vm1122, %v1106, %v1138
    %v1155 = vsel %vm1123, %v1107, %v1139
    %v1156 = vsel %vm1124, %v1108, %v1140
    %v1157 = vsel %vm1125, %v1109, %v1141
    %v1158 = vsel %vm516, %v1142, -9e+15
    %v1159 = vsel %vm517, %v1143, -9e+15
    %v1160 = vsel %vm518, %v1144, -9e+15
    %v1161 = vsel %vm519, %v1145, -9e+15
    %v1162 = vsel %vm520, %v1146, -9e+15
    %v1163 = vsel %vm521, %v1147, -9e+15
    %v1164 = vsel %vm522, %v1148, -9e+15
    %v1165 = vsel %vm523, %v1149, -9e+15
    %v1166 = vsel %vm524, %v1150, -9e+15
    %v1167 = vsel %vm525, %v1151, -9e+15
    %v1168 = vsel %vm526, %v1152, -9e+15
    %v1169 = vsel %vm527, %v1153, -9e+15
    %v1170 = vsel %vm528, %v1154, -9e+15
    %v1171 = vsel %vm529, %v1155, -9e+15
    %v1172 = vsel %vm530, %v1156, -9e+15
    %v1173 = vsel %vm531, %v1157, -9e+15
    %1174 = vmax.xlane.f32.xlu0 %v1158
    %v1175 = vpop.xlane.xlu0 %1174
    %1176 = vmax.xlane.f32.xlu0 %v1159
    %v1177 = vpop.xlane.xlu0 %1176
    %1178 = vmax.xlane.f32.xlu0 %v1160
    %v1179 = vpop.xlane.xlu0 %1178
    %1180 = vmax.xlane.f32.xlu0 %v1161
    %v1181 = vpop.xlane.xlu0 %1180
    %1182 = vmax.xlane.f32.xlu0 %v1162
    %v1183 = vpop.xlane.xlu0 %1182
    %1184 = vmax.xlane.f32.xlu0 %v1163
    %v1185 = vpop.xlane.xlu0 %1184
    %1186 = vmax.xlane.f32.xlu0 %v1164
    %v1187 = vpop.xlane.xlu0 %1186
    %1188 = vmax.xlane.f32.xlu0 %v1165
    %v1189 = vpop.xlane.xlu0 %1188
    %1190 = vmax.xlane.f32.xlu0 %v1166
    %v1191 = vpop.xlane.xlu0 %1190
    %1192 = vmax.xlane.f32.xlu0 %v1167
    %v1193 = vpop.xlane.xlu0 %1192
    %1194 = vmax.xlane.f32.xlu0 %v1168
    %v1195 = vpop.xlane.xlu0 %1194
    %1196 = vmax.xlane.f32.xlu0 %v1169
    %v1197 = vpop.xlane.xlu0 %1196
    %1198 = vmax.xlane.f32.xlu0 %v1170
    %v1199 = vpop.xlane.xlu0 %1198
    %1200 = vmax.xlane.f32.xlu0 %v1171
    %v1201 = vpop.xlane.xlu0 %1200
    %1202 = vmax.xlane.f32.xlu0 %v1172
    %v1203 = vpop.xlane.xlu0 %1202
    %1204 = vmax.xlane.f32.xlu0 %v1173
    %v1205 = vpop.xlane.xlu0 %1204
    %v1206 = vsub.f32 %v1158, %v1175
    %v1207 = vsub.f32 %v1159, %v1177
    %v1208 = vsub.f32 %v1160, %v1179
    %v1209 = vsub.f32 %v1161, %v1181
    %v1210 = vsub.f32 %v1162, %v1183
    %v1211 = vsub.f32 %v1163, %v1185
    %v1212 = vsub.f32 %v1164, %v1187
    %v1213 = vsub.f32 %v1165, %v1189
    %v1214 = vsub.f32 %v1166, %v1191
    %v1215 = vsub.f32 %v1167, %v1193
    %v1216 = vsub.f32 %v1168, %v1195
    %v1217 = vsub.f32 %v1169, %v1197
    %v1218 = vsub.f32 %v1170, %v1199
    %v1219 = vsub.f32 %v1171, %v1201
    %v1220 = vsub.f32 %v1172, %v1203
    %v1221 = vsub.f32 %v1173, %v1205
    %v1222 = vmul.f32 %v1206, 1.442695
    %v1223 = vpow.pop %v1222
    %v1224 = vmul.f32 %v1207, 1.442695
    %v1225 = vpow.pop %v1224
    %v1226 = vmul.f32 %v1208, 1.442695
    %v1227 = vpow.pop %v1226
    %v1228 = vmul.f32 %v1209, 1.442695
    %v1229 = vpow.pop %v1228
    %v1230 = vmul.f32 %v1210, 1.442695
    %v1231 = vpow.pop %v1230
    %v1232 = vmul.f32 %v1211, 1.442695
    %v1233 = vpow.pop %v1232
    %v1234 = vmul.f32 %v1212, 1.442695
    %v1235 = vpow.pop %v1234
    %v1236 = vmul.f32 %v1213, 1.442695
    %v1237 = vpow.pop %v1236
    %v1238 = vmul.f32 %v1214, 1.442695
    %v1239 = vpow.pop %v1238
    %v1240 = vmul.f32 %v1215, 1.442695
    %v1241 = vpow.pop %v1240
    %v1242 = vmul.f32 %v1216, 1.442695
    %v1243 = vpow.pop %v1242
    %v1244 = vmul.f32 %v1217, 1.442695
    %v1245 = vpow.pop %v1244
    %v1246 = vmul.f32 %v1218, 1.442695
    %v1247 = vpow.pop %v1246
    %v1248 = vmul.f32 %v1219, 1.442695
    %v1249 = vpow.pop %v1248
    %v1250 = vmul.f32 %v1220, 1.442695
    %v1251 = vpow.pop %v1250
    %v1252 = vmul.f32 %v1221, 1.442695
    %v1253 = vpow.pop %v1252
    %1254 = vadd.xlane.f32.xlu0 %v1223
    %v1255 = vpop.xlane.xlu0 %1254
    %1256 = vadd.xlane.f32.xlu0 %v1225
    %v1257 = vpop.xlane.xlu0 %1256
    %1258 = vadd.xlane.f32.xlu0 %v1227
    %v1259 = vpop.xlane.xlu0 %1258
    %1260 = vadd.xlane.f32.xlu0 %v1229
    %v1261 = vpop.xlane.xlu0 %1260
    %1262 = vadd.xlane.f32.xlu0 %v1231
    %v1263 = vpop.xlane.xlu0 %1262
    %1264 = vadd.xlane.f32.xlu0 %v1233
    %v1265 = vpop.xlane.xlu0 %1264
    %1266 = vadd.xlane.f32.xlu0 %v1235
    %v1267 = vpop.xlane.xlu0 %1266
    %1268 = vadd.xlane.f32.xlu0 %v1237
    %v1269 = vpop.xlane.xlu0 %1268
    %1270 = vadd.xlane.f32.xlu0 %v1239
    %v1271 = vpop.xlane.xlu0 %1270
    %1272 = vadd.xlane.f32.xlu0 %v1241
    %v1273 = vpop.xlane.xlu0 %1272
    %1274 = vadd.xlane.f32.xlu0 %v1243
    %v1275 = vpop.xlane.xlu0 %1274
    %1276 = vadd.xlane.f32.xlu0 %v1245
    %v1277 = vpop.xlane.xlu0 %1276
    %1278 = vadd.xlane.f32.xlu0 %v1247
    %v1279 = vpop.xlane.xlu0 %1278
    %1280 = vadd.xlane.f32.xlu0 %v1249
    %v1281 = vpop.xlane.xlu0 %1280
    %1282 = vadd.xlane.f32.xlu0 %v1251
    %v1283 = vpop.xlane.xlu0 %1282
    %1284 = vadd.xlane.f32.xlu0 %v1253
    %v1285 = vpop.xlane.xlu0 %1284
    %v1286 = vpack.c.bf16 %v1225, %v1223
    %v1287 = vpack.c.bf16 %v1229, %v1227
    %v1288 = vpack.c.bf16 %v1233, %v1231
    %v1289 = vpack.c.bf16 %v1237, %v1235
    %v1290 = vpack.c.bf16 %v1241, %v1239
    %v1291 = vpack.c.bf16 %v1245, %v1243
    %v1292 = vpack.c.bf16 %v1249, %v1247
    %v1293 = vpack.c.bf16 %v1253, %v1251
    %v1294 = vpack.c.bf16 %v904, %v902
    %v1295 = vpack.c.bf16 %v909, %v907
    %v1296 = vpack.c.bf16 %v914, %v912
    %v1297 = vpack.c.bf16 %v919, %v917
    %v1298 = vpack.c.bf16 %v924, %v922
    %v1299 = vpack.c.bf16 %v929, %v927
    %v1300 = vpack.c.bf16 %v934, %v932
    %v1301 = vpack.c.bf16 %v939, %v937
    %1302 = vmatpush.bf16.msra.mxu0 %v1301
    %1303 = vmatpush.bf16.msra.mxu0 %v1300
    %1304 = vmatpush.bf16.msra.mxu0 %v1299
    %1305 = vmatpush.bf16.msra.mxu0 %v1298
    %1306 = vmatpush.bf16.msra.mxu0 %v1297
    %1307 = vmatpush.bf16.msra.mxu0 %v1296
    %1308 = vmatpush.bf16.msra.mxu0 %v1295
    %1309 = vmatpush.bf16.msra.mxu0 %v1294
    %1310 = vmatmul.bf16.gmra.mxu0 %v1286
    %v1311 = vpop.f32.mrf.mxu0
    %v1312 = vadd.f32 0.0, %v1311
    %v1313 = vpop.f32.mrf.mxu0
    %v1314 = vadd.f32 0.0, %v1313
    %1315 = vmatmul.bf16.gmra.mxu0 %v1287
    %v1316 = vpop.f32.mrf.mxu0
    %v1317 = vadd.f32 0.0, %v1316
    %v1318 = vpop.f32.mrf.mxu0
    %v1319 = vadd.f32 0.0, %v1318
    %1320 = vmatmul.bf16.gmra.mxu0 %v1288
    %v1321 = vpop.f32.mrf.mxu0
    %v1322 = vadd.f32 0.0, %v1321
    %v1323 = vpop.f32.mrf.mxu0
    %v1324 = vadd.f32 0.0, %v1323
    %1325 = vmatmul.bf16.gmra.mxu0 %v1289
    %v1326 = vpop.f32.mrf.mxu0
    %v1327 = vadd.f32 0.0, %v1326
    %v1328 = vpop.f32.mrf.mxu0
    %v1329 = vadd.f32 0.0, %v1328
    %1330 = vmatmul.bf16.gmra.mxu0 %v1290
    %v1331 = vpop.f32.mrf.mxu0
    %v1332 = vadd.f32 0.0, %v1331
    %v1333 = vpop.f32.mrf.mxu0
    %v1334 = vadd.f32 0.0, %v1333
    %1335 = vmatmul.bf16.gmra.mxu0 %v1291
    %v1336 = vpop.f32.mrf.mxu0
    %v1337 = vadd.f32 0.0, %v1336
    %v1338 = vpop.f32.mrf.mxu0
    %v1339 = vadd.f32 0.0, %v1338
    %1340 = vmatmul.bf16.gmra.mxu0 %v1292
    %v1341 = vpop.f32.mrf.mxu0
    %v1342 = vadd.f32 0.0, %v1341
    %v1343 = vpop.f32.mrf.mxu0
    %v1344 = vadd.f32 0.0, %v1343
    %1345 = vmatmul.bf16.gmra.mxu0 %v1293
    %v1346 = vpop.f32.mrf.mxu0
    %v1347 = vadd.f32 0.0, %v1346
    %v1348 = vpop.f32.mrf.mxu0
    %v1349 = vadd.f32 0.0, %v1348
    %1350 = vdwg.mxu0
    %v1351 = vrcp.pop %v1255
    %v1352 = vrcp.pop %v1257
    %v1353 = vrcp.pop %v1259
    %v1354 = vrcp.pop %v1261
    %v1355 = vrcp.pop %v1263
    %v1356 = vrcp.pop %v1265
    %v1357 = vrcp.pop %v1267
    %v1358 = vrcp.pop %v1269
    %v1359 = vrcp.pop %v1271
    %v1360 = vrcp.pop %v1273
    %v1361 = vrcp.pop %v1275
    %v1362 = vrcp.pop %v1277
    %v1363 = vrcp.pop %v1279
    %v1364 = vrcp.pop %v1281
    %v1365 = vrcp.pop %v1283
    %v1366 = vrcp.pop %v1285
    %v1367 = vmul.f32 %v1312, %v1351
    %v1368 = vmul.f32 %v1314, %v1352
    %v1369 = vmul.f32 %v1317, %v1353
    %v1370 = vmul.f32 %v1319, %v1354
    %v1371 = vmul.f32 %v1322, %v1355
    %v1372 = vmul.f32 %v1324, %v1356
    %v1373 = vmul.f32 %v1327, %v1357
    %v1374 = vmul.f32 %v1329, %v1358
    %v1375 = vmul.f32 %v1332, %v1359
    %v1376 = vmul.f32 %v1334, %v1360
    %v1377 = vmul.f32 %v1337, %v1361
    %v1378 = vmul.f32 %v1339, %v1362
    %v1379 = vmul.f32 %v1342, %v1363
    %v1380 = vmul.f32 %v1344, %v1364
    %v1381 = vmul.f32 %v1347, %v1365
    %v1382 = vmul.f32 %v1349, %v1366
    %vm1383 = vcmp.gt.f32.partialorder %v1367, 0.0
    %vm1384 = vcmp.gt.f32.partialorder %v1368, 0.0
    %vm1385 = vcmp.gt.f32.partialorder %v1369, 0.0
    %vm1386 = vcmp.gt.f32.partialorder %v1370, 0.0
    %vm1387 = vcmp.gt.f32.partialorder %v1371, 0.0
    %vm1388 = vcmp.gt.f32.partialorder %v1372, 0.0
    %vm1389 = vcmp.gt.f32.partialorder %v1373, 0.0
    %vm1390 = vcmp.gt.f32.partialorder %v1374, 0.0
    %vm1391 = vcmp.gt.f32.partialorder %v1375, 0.0
    %vm1392 = vcmp.gt.f32.partialorder %v1376, 0.0
    %vm1393 = vcmp.gt.f32.partialorder %v1377, 0.0
    %vm1394 = vcmp.gt.f32.partialorder %v1378, 0.0
    %vm1395 = vcmp.gt.f32.partialorder %v1379, 0.0
    %vm1396 = vcmp.gt.f32.partialorder %v1380, 0.0
    %vm1397 = vcmp.gt.f32.partialorder %v1381, 0.0
    %vm1398 = vcmp.gt.f32.partialorder %v1382, 0.0
    %v1399 = vmin.f32 %v1367, 0.0
    %v1400 = vmin.f32 %v1368, 0.0
    %v1401 = vmin.f32 %v1369, 0.0
    %v1402 = vmin.f32 %v1370, 0.0
    %v1403 = vmin.f32 %v1371, 0.0
    %v1404 = vmin.f32 %v1372, 0.0
    %v1405 = vmin.f32 %v1373, 0.0
    %v1406 = vmin.f32 %v1374, 0.0
    %v1407 = vmin.f32 %v1375, 0.0
    %v1408 = vmin.f32 %v1376, 0.0
    %v1409 = vmin.f32 %v1377, 0.0
    %v1410 = vmin.f32 %v1378, 0.0
    %v1411 = vmin.f32 %v1379, 0.0
    %v1412 = vmin.f32 %v1380, 0.0
    %v1413 = vmin.f32 %v1381, 0.0
    %v1414 = vmin.f32 %v1382, 0.0
    %v1415 = vmul.f32 %v1399, 1.442695
    %v1416 = vpow.pop %v1415
    %v1417 = vmul.f32 %v1400, 1.442695
    %v1418 = vpow.pop %v1417
    %v1419 = vmul.f32 %v1401, 1.442695
    %v1420 = vpow.pop %v1419
    %v1421 = vmul.f32 %v1402, 1.442695
    %v1422 = vpow.pop %v1421
    %v1423 = vmul.f32 %v1403, 1.442695
    %v1424 = vpow.pop %v1423
    %v1425 = vmul.f32 %v1404, 1.442695
    %v1426 = vpow.pop %v1425
    %v1427 = vmul.f32 %v1405, 1.442695
    %v1428 = vpow.pop %v1427
    %v1429 = vmul.f32 %v1406, 1.442695
    %v1430 = vpow.pop %v1429
    %v1431 = vmul.f32 %v1407, 1.442695
    %v1432 = vpow.pop %v1431
    %v1433 = vmul.f32 %v1408, 1.442695
    %v1434 = vpow.pop %v1433
    %v1435 = vmul.f32 %v1409, 1.442695
    %v1436 = vpow.pop %v1435
    %v1437 = vmul.f32 %v1410, 1.442695
    %v1438 = vpow.pop %v1437
    %v1439 = vmul.f32 %v1411, 1.442695
    %v1440 = vpow.pop %v1439
    %v1441 = vmul.f32 %v1412, 1.442695
    %v1442 = vpow.pop %v1441
    %v1443 = vmul.f32 %v1413, 1.442695
    %v1444 = vpow.pop %v1443
    %v1445 = vmul.f32 %v1414, 1.442695
    %v1446 = vpow.pop %v1445
    %v1447 = vsub.f32 %v1416, 1.0
    %v1448 = vsub.f32 %v1418, 1.0
    %v1449 = vsub.f32 %v1420, 1.0
    %v1450 = vsub.f32 %v1422, 1.0
    %v1451 = vsub.f32 %v1424, 1.0
    %v1452 = vsub.f32 %v1426, 1.0
    %v1453 = vsub.f32 %v1428, 1.0
    %v1454 = vsub.f32 %v1430, 1.0
    %v1455 = vsub.f32 %v1432, 1.0
    %v1456 = vsub.f32 %v1434, 1.0
    %v1457 = vsub.f32 %v1436, 1.0
    %v1458 = vsub.f32 %v1438, 1.0
    %v1459 = vsub.f32 %v1440, 1.0
    %v1460 = vsub.f32 %v1442, 1.0
    %v1461 = vsub.f32 %v1444, 1.0
    %v1462 = vsub.f32 %v1446, 1.0
    %v1463 = vsel %vm1383, %v1367, %v1447
    %v1464 = vsel %vm1384, %v1368, %v1448
    %v1465 = vsel %vm1385, %v1369, %v1449
    %v1466 = vsel %vm1386, %v1370, %v1450
    %v1467 = vsel %vm1387, %v1371, %v1451
    %v1468 = vsel %vm1388, %v1372, %v1452
    %v1469 = vsel %vm1389, %v1373, %v1453
    %v1470 = vsel %vm1390, %v1374, %v1454
    %v1471 = vsel %vm1391, %v1375, %v1455
    %v1472 = vsel %vm1392, %v1376, %v1456
    %v1473 = vsel %vm1393, %v1377, %v1457
    %v1474 = vsel %vm1394, %v1378, %v1458
    %v1475 = vsel %vm1395, %v1379, %v1459
    %v1476 = vsel %vm1396, %v1380, %v1460
    %v1477 = vsel %vm1397, %v1381, %v1461
    %v1478 = vsel %vm1398, %v1382, %v1462
    %v1479 = vmul.f32 %v1463, %v1463
    %v1480 = vmul.f32 %v1464, %v1464
    %v1481 = vmul.f32 %v1465, %v1465
    %v1482 = vmul.f32 %v1466, %v1466
    %v1483 = vmul.f32 %v1467, %v1467
    %v1484 = vmul.f32 %v1468, %v1468
    %v1485 = vmul.f32 %v1469, %v1469
    %v1486 = vmul.f32 %v1470, %v1470
    %v1487 = vmul.f32 %v1471, %v1471
    %v1488 = vmul.f32 %v1472, %v1472
    %v1489 = vmul.f32 %v1473, %v1473
    %v1490 = vmul.f32 %v1474, %v1474
    %v1491 = vmul.f32 %v1475, %v1475
    %v1492 = vmul.f32 %v1476, %v1476
    %v1493 = vmul.f32 %v1477, %v1477
    %v1494 = vmul.f32 %v1478, %v1478
    %v1495 = vsel %vm941, %v1479, 0.0
    %1496 = vadd.xlane.f32.xlu0 %v1495
    %v1497 = vpop.xlane.xlu0 %1496
    %v1498 = vsel %vm941, %v1480, 0.0
    %1499 = vadd.xlane.f32.xlu0 %v1498
    %v1500 = vpop.xlane.xlu0 %1499
    %v1501 = vsel %vm941, %v1481, 0.0
    %1502 = vadd.xlane.f32.xlu0 %v1501
    %v1503 = vpop.xlane.xlu0 %1502
    %v1504 = vsel %vm941, %v1482, 0.0
    %1505 = vadd.xlane.f32.xlu0 %v1504
    %v1506 = vpop.xlane.xlu0 %1505
    %v1507 = vsel %vm941, %v1483, 0.0
    %1508 = vadd.xlane.f32.xlu0 %v1507
    %v1509 = vpop.xlane.xlu0 %1508
    %v1510 = vsel %vm941, %v1484, 0.0
    %1511 = vadd.xlane.f32.xlu0 %v1510
    %v1512 = vpop.xlane.xlu0 %1511
    %v1513 = vsel %vm941, %v1485, 0.0
    %1514 = vadd.xlane.f32.xlu0 %v1513
    %v1515 = vpop.xlane.xlu0 %1514
    %v1516 = vsel %vm941, %v1486, 0.0
    %1517 = vadd.xlane.f32.xlu0 %v1516
    %v1518 = vpop.xlane.xlu0 %1517
    %v1519 = vsel %vm941, %v1487, 0.0
    %1520 = vadd.xlane.f32.xlu0 %v1519
    %v1521 = vpop.xlane.xlu0 %1520
    %v1522 = vsel %vm941, %v1488, 0.0
    %1523 = vadd.xlane.f32.xlu0 %v1522
    %v1524 = vpop.xlane.xlu0 %1523
    %v1525 = vsel %vm941, %v1489, 0.0
    %1526 = vadd.xlane.f32.xlu0 %v1525
    %v1527 = vpop.xlane.xlu0 %1526
    %v1528 = vsel %vm941, %v1490, 0.0
    %1529 = vadd.xlane.f32.xlu0 %v1528
    %v1530 = vpop.xlane.xlu0 %1529
    %v1531 = vsel %vm941, %v1491, 0.0
    %1532 = vadd.xlane.f32.xlu0 %v1531
    %v1533 = vpop.xlane.xlu0 %1532
    %v1534 = vsel %vm941, %v1492, 0.0
    %1535 = vadd.xlane.f32.xlu0 %v1534
    %v1536 = vpop.xlane.xlu0 %1535
    %v1537 = vsel %vm941, %v1493, 0.0
    %1538 = vadd.xlane.f32.xlu0 %v1537
    %v1539 = vpop.xlane.xlu0 %1538
    %v1540 = vsel %vm941, %v1494, 0.0
    %1541 = vadd.xlane.f32.xlu0 %v1540
    %v1542 = vpop.xlane.xlu0 %1541
    %v1543 = vadd.f32 %v1497, 1e-24
    %v1544 = vadd.f32 %v1500, 1e-24
    %v1545 = vadd.f32 %v1503, 1e-24
    %v1546 = vadd.f32 %v1506, 1e-24
    %v1547 = vadd.f32 %v1509, 1e-24
    %v1548 = vadd.f32 %v1512, 1e-24
    %v1549 = vadd.f32 %v1515, 1e-24
    %v1550 = vadd.f32 %v1518, 1e-24
    %v1551 = vadd.f32 %v1521, 1e-24
    %v1552 = vadd.f32 %v1524, 1e-24
    %v1553 = vadd.f32 %v1527, 1e-24
    %v1554 = vadd.f32 %v1530, 1e-24
    %v1555 = vadd.f32 %v1533, 1e-24
    %v1556 = vadd.f32 %v1536, 1e-24
    %v1557 = vadd.f32 %v1539, 1e-24
    %v1558 = vadd.f32 %v1542, 1e-24
    %v1559 = vrsqrt.pop %v1543
    %v1560 = vmul.f32 %v1559, %v1543
    %v1561 = vmul.f32 %v1560, %v1559
    %v1562 = vmul.f32 0.5, %v1561
    %v1563 = vsub.f32 1.5, %v1562
    %v1564 = vmul.f32 %v1559, %v1563
    %vm1565 = vweird.f32 %v1543
    %vm1566 = vweird.f32 %v1559
    %vm1567 = vmor %vm1565, %vm1566
    %v1568 = vsel %vm1567, %v1559, %v1564
    %v1569 = vrsqrt.pop %v1544
    %v1570 = vmul.f32 %v1569, %v1544
    %v1571 = vmul.f32 %v1570, %v1569
    %v1572 = vmul.f32 0.5, %v1571
    %v1573 = vsub.f32 1.5, %v1572
    %v1574 = vmul.f32 %v1569, %v1573
    %vm1575 = vweird.f32 %v1544
    %vm1576 = vweird.f32 %v1569
    %vm1577 = vmor %vm1575, %vm1576
    %v1578 = vsel %vm1577, %v1569, %v1574
    %v1579 = vrsqrt.pop %v1545
    %v1580 = vmul.f32 %v1579, %v1545
    %v1581 = vmul.f32 %v1580, %v1579
    %v1582 = vmul.f32 0.5, %v1581
    %v1583 = vsub.f32 1.5, %v1582
    %v1584 = vmul.f32 %v1579, %v1583
    %vm1585 = vweird.f32 %v1545
    %vm1586 = vweird.f32 %v1579
    %vm1587 = vmor %vm1585, %vm1586
    %v1588 = vsel %vm1587, %v1579, %v1584
    %v1589 = vrsqrt.pop %v1546
    %v1590 = vmul.f32 %v1589, %v1546
    %v1591 = vmul.f32 %v1590, %v1589
    %v1592 = vmul.f32 0.5, %v1591
    %v1593 = vsub.f32 1.5, %v1592
    %v1594 = vmul.f32 %v1589, %v1593
    %vm1595 = vweird.f32 %v1546
    %vm1596 = vweird.f32 %v1589
    %vm1597 = vmor %vm1595, %vm1596
    %v1598 = vsel %vm1597, %v1589, %v1594
    %v1599 = vrsqrt.pop %v1547
    %v1600 = vmul.f32 %v1599, %v1547
    %v1601 = vmul.f32 %v1600, %v1599
    %v1602 = vmul.f32 0.5, %v1601
    %v1603 = vsub.f32 1.5, %v1602
    %v1604 = vmul.f32 %v1599, %v1603
    %vm1605 = vweird.f32 %v1547
    %vm1606 = vweird.f32 %v1599
    %vm1607 = vmor %vm1605, %vm1606
    %v1608 = vsel %vm1607, %v1599, %v1604
    %v1609 = vrsqrt.pop %v1548
    %v1610 = vmul.f32 %v1609, %v1548
    %v1611 = vmul.f32 %v1610, %v1609
    %v1612 = vmul.f32 0.5, %v1611
    %v1613 = vsub.f32 1.5, %v1612
    %v1614 = vmul.f32 %v1609, %v1613
    %vm1615 = vweird.f32 %v1548
    %vm1616 = vweird.f32 %v1609
    %vm1617 = vmor %vm1615, %vm1616
    %v1618 = vsel %vm1617, %v1609, %v1614
    %v1619 = vrsqrt.pop %v1549
    %v1620 = vmul.f32 %v1619, %v1549
    %v1621 = vmul.f32 %v1620, %v1619
    %v1622 = vmul.f32 0.5, %v1621
    %v1623 = vsub.f32 1.5, %v1622
    %v1624 = vmul.f32 %v1619, %v1623
    %vm1625 = vweird.f32 %v1549
    %vm1626 = vweird.f32 %v1619
    %vm1627 = vmor %vm1625, %vm1626
    %v1628 = vsel %vm1627, %v1619, %v1624
    %v1629 = vrsqrt.pop %v1550
    %v1630 = vmul.f32 %v1629, %v1550
    %v1631 = vmul.f32 %v1630, %v1629
    %v1632 = vmul.f32 0.5, %v1631
    %v1633 = vsub.f32 1.5, %v1632
    %v1634 = vmul.f32 %v1629, %v1633
    %vm1635 = vweird.f32 %v1550
    %vm1636 = vweird.f32 %v1629
    %vm1637 = vmor %vm1635, %vm1636
    %v1638 = vsel %vm1637, %v1629, %v1634
    %v1639 = vrsqrt.pop %v1551
    %v1640 = vmul.f32 %v1639, %v1551
    %v1641 = vmul.f32 %v1640, %v1639
    %v1642 = vmul.f32 0.5, %v1641
    %v1643 = vsub.f32 1.5, %v1642
    %v1644 = vmul.f32 %v1639, %v1643
    %vm1645 = vweird.f32 %v1551
    %vm1646 = vweird.f32 %v1639
    %vm1647 = vmor %vm1645, %vm1646
    %v1648 = vsel %vm1647, %v1639, %v1644
    %v1649 = vrsqrt.pop %v1552
    %v1650 = vmul.f32 %v1649, %v1552
    %v1651 = vmul.f32 %v1650, %v1649
    %v1652 = vmul.f32 0.5, %v1651
    %v1653 = vsub.f32 1.5, %v1652
    %v1654 = vmul.f32 %v1649, %v1653
    %vm1655 = vweird.f32 %v1552
    %vm1656 = vweird.f32 %v1649
    %vm1657 = vmor %vm1655, %vm1656
    %v1658 = vsel %vm1657, %v1649, %v1654
    %v1659 = vrsqrt.pop %v1553
    %v1660 = vmul.f32 %v1659, %v1553
    %v1661 = vmul.f32 %v1660, %v1659
    %v1662 = vmul.f32 0.5, %v1661
    %v1663 = vsub.f32 1.5, %v1662
    %v1664 = vmul.f32 %v1659, %v1663
    %vm1665 = vweird.f32 %v1553
    %vm1666 = vweird.f32 %v1659
    %vm1667 = vmor %vm1665, %vm1666
    %v1668 = vsel %vm1667, %v1659, %v1664
    %v1669 = vrsqrt.pop %v1554
    %v1670 = vmul.f32 %v1669, %v1554
    %v1671 = vmul.f32 %v1670, %v1669
    %v1672 = vmul.f32 0.5, %v1671
    %v1673 = vsub.f32 1.5, %v1672
    %v1674 = vmul.f32 %v1669, %v1673
    %vm1675 = vweird.f32 %v1554
    %vm1676 = vweird.f32 %v1669
    %vm1677 = vmor %vm1675, %vm1676
    %v1678 = vsel %vm1677, %v1669, %v1674
    %v1679 = vrsqrt.pop %v1555
    %v1680 = vmul.f32 %v1679, %v1555
    %v1681 = vmul.f32 %v1680, %v1679
    %v1682 = vmul.f32 0.5, %v1681
    %v1683 = vsub.f32 1.5, %v1682
    %v1684 = vmul.f32 %v1679, %v1683
    %vm1685 = vweird.f32 %v1555
    %vm1686 = vweird.f32 %v1679
    %vm1687 = vmor %vm1685, %vm1686
    %v1688 = vsel %vm1687, %v1679, %v1684
    %v1689 = vrsqrt.pop %v1556
    %v1690 = vmul.f32 %v1689, %v1556
    %v1691 = vmul.f32 %v1690, %v1689
    %v1692 = vmul.f32 0.5, %v1691
    %v1693 = vsub.f32 1.5, %v1692
    %v1694 = vmul.f32 %v1689, %v1693
    %vm1695 = vweird.f32 %v1556
    %vm1696 = vweird.f32 %v1689
    %vm1697 = vmor %vm1695, %vm1696
    %v1698 = vsel %vm1697, %v1689, %v1694
    %v1699 = vrsqrt.pop %v1557
    %v1700 = vmul.f32 %v1699, %v1557
    %v1701 = vmul.f32 %v1700, %v1699
    %v1702 = vmul.f32 0.5, %v1701
    %v1703 = vsub.f32 1.5, %v1702
    %v1704 = vmul.f32 %v1699, %v1703
    %vm1705 = vweird.f32 %v1557
    %vm1706 = vweird.f32 %v1699
    %vm1707 = vmor %vm1705, %vm1706
    %v1708 = vsel %vm1707, %v1699, %v1704
    %v1709 = vrsqrt.pop %v1558
    %v1710 = vmul.f32 %v1709, %v1558
    %v1711 = vmul.f32 %v1710, %v1709
    %v1712 = vmul.f32 0.5, %v1711
    %v1713 = vsub.f32 1.5, %v1712
    %v1714 = vmul.f32 %v1709, %v1713
    %vm1715 = vweird.f32 %v1558
    %vm1716 = vweird.f32 %v1709
    %vm1717 = vmor %vm1715, %vm1716
    %v1718 = vsel %vm1717, %v1709, %v1714
    %v1719 = vmul.f32 %v1463, %v1568
    %v1720 = vmul.f32 %v1464, %v1578
    %v1721 = vmul.f32 %v1465, %v1588
    %v1722 = vmul.f32 %v1466, %v1598
    %v1723 = vmul.f32 %v1467, %v1608
    %v1724 = vmul.f32 %v1468, %v1618
    %v1725 = vmul.f32 %v1469, %v1628
    %v1726 = vmul.f32 %v1470, %v1638
    %v1727 = vmul.f32 %v1471, %v1648
    %v1728 = vmul.f32 %v1472, %v1658
    %v1729 = vmul.f32 %v1473, %v1668
    %v1730 = vmul.f32 %v1474, %v1678
    %v1731 = vmul.f32 %v1475, %v1688
    %v1732 = vmul.f32 %v1476, %v1698
    %v1733 = vmul.f32 %v1477, %v1708
    %v1734 = vmul.f32 %v1478, %v1718
    %v1735 = vpack.c.bf16 %v1720, %v1719
    %v1736 = vpack.c.bf16 %v1722, %v1721
    %v1737 = vpack.c.bf16 %v1724, %v1723
    %v1738 = vpack.c.bf16 %v1726, %v1725
    %v1739 = vpack.c.bf16 %v1728, %v1727
    %v1740 = vpack.c.bf16 %v1730, %v1729
    %v1741 = vpack.c.bf16 %v1732, %v1731
    %v1742 = vpack.c.bf16 %v1734, %v1733
    %v1744 = vsel %vm941, %v1735, 0
    %v1747 = vsel %vm941, %v1736, 0
    %v1750 = vsel %vm941, %v1737, 0
    %v1753 = vsel %vm941, %v1738, 0
    %v1756 = vsel %vm941, %v1739, 0
    %v1759 = vsel %vm941, %v1740, 0
    %v1762 = vsel %vm941, %v1741, 0
    %v1765 = vsel %vm941, %v1742, 0
    %1767 = vmatpush.bf16.xpose.msra.mxu0 %v1765
    %1768 = vmatpush.bf16.xpose.msra.mxu0 %v1762
    %1769 = vmatpush.bf16.xpose.msra.mxu0 %v1759
    %1770 = vmatpush.bf16.xpose.msra.mxu0 %v1756
    %1771 = vmatpush.bf16.xpose.msra.mxu0 %v1753
    %1772 = vmatpush.bf16.xpose.msra.mxu0 %v1750
    %1773 = vmatpush.bf16.xpose.msra.mxu0 %v1747
    %1774 = vmatpush.bf16.xpose.msra.mxu0 %v1744
    %1775 = vmatmul.bf16.gmra.mxu0 %v1744
    %v1776 = vpop.f32.mrf.mxu0
    %v1777 = vadd.f32 0.0, %v1776
    %v1778 = vpop.f32.mrf.mxu0
    %v1779 = vadd.f32 0.0, %v1778
    %1780 = vmatmul.bf16.gmra.mxu0 %v1747
    %v1781 = vpop.f32.mrf.mxu0
    %v1782 = vadd.f32 0.0, %v1781
    %v1783 = vpop.f32.mrf.mxu0
    %v1784 = vadd.f32 0.0, %v1783
    %1785 = vmatmul.bf16.gmra.mxu0 %v1750
    %v1786 = vpop.f32.mrf.mxu0
    %v1787 = vadd.f32 0.0, %v1786
    %v1788 = vpop.f32.mrf.mxu0
    %v1789 = vadd.f32 0.0, %v1788
    %1790 = vmatmul.bf16.gmra.mxu0 %v1753
    %v1791 = vpop.f32.mrf.mxu0
    %v1792 = vadd.f32 0.0, %v1791
    %v1793 = vpop.f32.mrf.mxu0
    %v1794 = vadd.f32 0.0, %v1793
    %1795 = vmatmul.bf16.gmra.mxu0 %v1756
    %v1796 = vpop.f32.mrf.mxu0
    %v1797 = vadd.f32 0.0, %v1796
    %v1798 = vpop.f32.mrf.mxu0
    %v1799 = vadd.f32 0.0, %v1798
    %1800 = vmatmul.bf16.gmra.mxu0 %v1759
    %v1801 = vpop.f32.mrf.mxu0
    %v1802 = vadd.f32 0.0, %v1801
    %v1803 = vpop.f32.mrf.mxu0
    %v1804 = vadd.f32 0.0, %v1803
    %1805 = vmatmul.bf16.gmra.mxu0 %v1762
    %v1806 = vpop.f32.mrf.mxu0
    %v1807 = vadd.f32 0.0, %v1806
    %v1808 = vpop.f32.mrf.mxu0
    %v1809 = vadd.f32 0.0, %v1808
    %1810 = vmatmul.bf16.gmra.mxu0 %v1765
    %v1811 = vpop.f32.mrf.mxu0
    %v1812 = vadd.f32 0.0, %v1811
    %v1813 = vpop.f32.mrf.mxu0
    %v1814 = vadd.f32 0.0, %v1813
    %1815 = vdwg.mxu0
    %v1816 = vmul.f32 %v1777, 0.5
    %v1817 = vmul.f32 %v1779, 0.5
    %v1818 = vmul.f32 %v1782, 0.5
    %v1819 = vmul.f32 %v1784, 0.5
    %v1820 = vmul.f32 %v1787, 0.5
    %v1821 = vmul.f32 %v1789, 0.5
    %v1822 = vmul.f32 %v1792, 0.5
    %v1823 = vmul.f32 %v1794, 0.5
    %v1824 = vmul.f32 %v1797, 0.5
    %v1825 = vmul.f32 %v1799, 0.5
    %v1826 = vmul.f32 %v1802, 0.5
    %v1827 = vmul.f32 %v1804, 0.5
    %v1828 = vmul.f32 %v1807, 0.5
    %v1829 = vmul.f32 %v1809, 0.5
    %v1830 = vmul.f32 %v1812, 0.5
    %v1831 = vmul.f32 %v1814, 0.5
    %v1832 = vtanh.pop %v1816
    %v1833 = vtanh.pop %v1817
    %v1834 = vtanh.pop %v1818
    %v1835 = vtanh.pop %v1819
    %v1836 = vtanh.pop %v1820
    %v1837 = vtanh.pop %v1821
    %v1838 = vtanh.pop %v1822
    %v1839 = vtanh.pop %v1823
    %v1840 = vtanh.pop %v1824
    %v1841 = vtanh.pop %v1825
    %v1842 = vtanh.pop %v1826
    %v1843 = vtanh.pop %v1827
    %v1844 = vtanh.pop %v1828
    %v1845 = vtanh.pop %v1829
    %v1846 = vtanh.pop %v1830
    %v1847 = vtanh.pop %v1831
    %v1848 = vadd.f32 %v1832, 1.0
    %v1849 = vadd.f32 %v1833, 1.0
    %v1850 = vadd.f32 %v1834, 1.0
    %v1851 = vadd.f32 %v1835, 1.0
    %v1852 = vadd.f32 %v1836, 1.0
    %v1853 = vadd.f32 %v1837, 1.0
    %v1854 = vadd.f32 %v1838, 1.0
    %v1855 = vadd.f32 %v1839, 1.0
    %v1856 = vadd.f32 %v1840, 1.0
    %v1857 = vadd.f32 %v1841, 1.0
    %v1858 = vadd.f32 %v1842, 1.0
    %v1859 = vadd.f32 %v1843, 1.0
    %v1860 = vadd.f32 %v1844, 1.0
    %v1861 = vadd.f32 %v1845, 1.0
    %v1862 = vadd.f32 %v1846, 1.0
    %v1863 = vadd.f32 %v1847, 1.0
    %v1864 = vmul.f32 %v1848, 0.5
    %v1865 = vmul.f32 %v1849, 0.5
    %v1866 = vmul.f32 %v1850, 0.5
    %v1867 = vmul.f32 %v1851, 0.5
    %v1868 = vmul.f32 %v1852, 0.5
    %v1869 = vmul.f32 %v1853, 0.5
    %v1870 = vmul.f32 %v1854, 0.5
    %v1871 = vmul.f32 %v1855, 0.5
    %v1872 = vmul.f32 %v1856, 0.5
    %v1873 = vmul.f32 %v1857, 0.5
    %v1874 = vmul.f32 %v1858, 0.5
    %v1875 = vmul.f32 %v1859, 0.5
    %v1876 = vmul.f32 %v1860, 0.5
    %v1877 = vmul.f32 %v1861, 0.5
    %v1878 = vmul.f32 %v1862, 0.5
    %v1879 = vmul.f32 %v1863, 0.5
    %1880 = vst [vmem:[#allocation2] sm:$0xff] %v1864
    %1881 = vst [vmem:[#allocation2 + $0x8] sm:$0xff] %v1865
    %1882 = vst [vmem:[#allocation2 + $0x10] sm:$0xff] %v1866
    %1883 = vst [vmem:[#allocation2 + $0x18] sm:$0xff] %v1867
    %1884 = vst [vmem:[#allocation2 + $0x20] sm:$0xff] %v1868
    %1885 = vst [vmem:[#allocation2 + $0x28] sm:$0xff] %v1869
    %1886 = vst [vmem:[#allocation2 + $0x30] sm:$0xff] %v1870
    %1887 = vst [vmem:[#allocation2 + $0x38] sm:$0xff] %v1871
    %1888 = vst [vmem:[#allocation2 + $0x40] sm:$0xff] %v1872
    %1889 = vst [vmem:[#allocation2 + $0x48] sm:$0xff] %v1873
    %1890 = vst [vmem:[#allocation2 + $0x50] sm:$0xff] %v1874
    %1891 = vst [vmem:[#allocation2 + $0x58] sm:$0xff] %v1875
    %1892 = vst [vmem:[#allocation2 + $0x60] sm:$0xff] %v1876
    %1893 = vst [vmem:[#allocation2 + $0x68] sm:$0xff] %v1877
    %1894 = vst [vmem:[#allocation2 + $0x70] sm:$0xff] %v1878
    %1895 = vst [vmem:[#allocation2 + $0x78] sm:$0xff] %v1879
    %v1896 = vld [vmem:[%s6] sm:$0xff]
    %v1897 = vmul.f32 %v1568, %v1568
    %v1898 = vmul.f32 %v1578, %v1578
    %v1899 = vmul.f32 %v1588, %v1588
    %v1900 = vmul.f32 %v1598, %v1598
    %v1901 = vmul.f32 %v1608, %v1608
    %v1902 = vmul.f32 %v1618, %v1618
    %v1903 = vmul.f32 %v1628, %v1628
    %v1904 = vmul.f32 %v1638, %v1638
    %v1905 = vmul.f32 %v1648, %v1648
    %v1906 = vmul.f32 %v1658, %v1658
    %v1907 = vmul.f32 %v1668, %v1668
    %v1908 = vmul.f32 %v1678, %v1678
    %v1909 = vmul.f32 %v1688, %v1688
    %v1910 = vmul.f32 %v1698, %v1698
    %v1911 = vmul.f32 %v1708, %v1708
    %v1912 = vmul.f32 %v1718, %v1718
    %v1913 = vmul.f32 %v1497, %v1897
    %v1914 = vmul.f32 %v1500, %v1898
    %v1915 = vmul.f32 %v1503, %v1899
    %v1916 = vmul.f32 %v1506, %v1900
    %v1917 = vmul.f32 %v1509, %v1901
    %v1918 = vmul.f32 %v1512, %v1902
    %v1919 = vmul.f32 %v1515, %v1903
    %v1920 = vmul.f32 %v1518, %v1904
    %v1921 = vmul.f32 %v1521, %v1905
    %v1922 = vmul.f32 %v1524, %v1906
    %v1923 = vmul.f32 %v1527, %v1907
    %v1924 = vmul.f32 %v1530, %v1908
    %v1925 = vmul.f32 %v1533, %v1909
    %v1926 = vmul.f32 %v1536, %v1910
    %v1927 = vmul.f32 %v1539, %v1911
    %v1928 = vmul.f32 %v1542, %v1912
    %v1929 = vmul.f32 %v1896, %v1896
    %v1931 = vsel %vm941, 1.0, 0
    %v1934 = vsel %vm941, %v1929, 0
    %1936 = vmatpush.xpose.msra.mxu0 0.0
    %1937 = vmatpush.xpose.msra.mxu0 0.0
    %1938 = vmatpush.xpose.msra.mxu0 0.0
    %1939 = vmatpush.xpose.msra.mxu0 0.0
    %1940 = vmatpush.xpose.msra.mxu0 0.0
    %1941 = vmatpush.xpose.msra.mxu0 0.0
    %1942 = vmatpush.xpose.msra.mxu0 0.0
    %1943 = vmatpush.xpose.msra.mxu0 0.0
    %1944 = vmatpush.xpose.msra.mxu0 0.0
    %1945 = vmatpush.xpose.msra.mxu0 0.0
    %1946 = vmatpush.xpose.msra.mxu0 0.0
    %1947 = vmatpush.xpose.msra.mxu0 0.0
    %1948 = vmatpush.xpose.msra.mxu0 0.0
    %1949 = vmatpush.xpose.msra.mxu0 0.0
    %1950 = vmatpush.xpose.msra.mxu0 0.0
    %1951 = vmatpush.xpose.msra.mxu0 %v1934
    %1952 = vmatmul.f32.gmra.mxu0 %v1931
    %v1953 = vpop.f32.mrf.mxu0
    %v1954 = vadd.f32 0.0, %v1953
    %1955 = vdwg.mxu0
    %v1956 = vpack.c.bf16 %v1896, %v1896
    %v1958 = vsel %vm941, %v1956, 0
    %1960 = vmatpush.bf16.xpose.msra.mxu0 0
    %1961 = vmatpush.bf16.xpose.msra.mxu0 0
    %1962 = vmatpush.bf16.xpose.msra.mxu0 0
    %1963 = vmatpush.bf16.xpose.msra.mxu0 0
    %1964 = vmatpush.bf16.xpose.msra.mxu0 0
    %1965 = vmatpush.bf16.xpose.msra.mxu0 0
    %1966 = vmatpush.bf16.xpose.msra.mxu0 0
    %1967 = vmatpush.bf16.xpose.msra.mxu0 %v1958
    %1968 = vmatmul.bf16.gmra.mxu0 %v1744
    %v1969 = vpop.f32.mrf.mxu0
    %v1970 = vadd.f32 0.0, %v1969
    %v1971 = vpop.f32.mrf.mxu0
    %v1972 = vadd.f32 0.0, %v1971
    %1973 = vmatmul.bf16.gmra.mxu0 %v1747
    %v1974 = vpop.f32.mrf.mxu0
    %v1975 = vadd.f32 0.0, %v1974
    %v1976 = vpop.f32.mrf.mxu0
    %v1977 = vadd.f32 0.0, %v1976
    %1978 = vmatmul.bf16.gmra.mxu0 %v1750
    %v1979 = vpop.f32.mrf.mxu0
    %v1980 = vadd.f32 0.0, %v1979
    %v1981 = vpop.f32.mrf.mxu0
    %v1982 = vadd.f32 0.0, %v1981
    %1983 = vmatmul.bf16.gmra.mxu0 %v1753
    %v1984 = vpop.f32.mrf.mxu0
    %v1985 = vadd.f32 0.0, %v1984
    %v1986 = vpop.f32.mrf.mxu0
    %v1987 = vadd.f32 0.0, %v1986
    %1988 = vmatmul.bf16.gmra.mxu0 %v1756
    %v1989 = vpop.f32.mrf.mxu0
    %v1990 = vadd.f32 0.0, %v1989
    %v1991 = vpop.f32.mrf.mxu0
    %v1992 = vadd.f32 0.0, %v1991
    %1993 = vmatmul.bf16.gmra.mxu0 %v1759
    %v1994 = vpop.f32.mrf.mxu0
    %v1995 = vadd.f32 0.0, %v1994
    %v1996 = vpop.f32.mrf.mxu0
    %v1997 = vadd.f32 0.0, %v1996
    %1998 = vmatmul.bf16.gmra.mxu0 %v1762
    %v1999 = vpop.f32.mrf.mxu0
    %v2000 = vadd.f32 0.0, %v1999
    %v2001 = vpop.f32.mrf.mxu0
    %v2002 = vadd.f32 0.0, %v2001
    %2003 = vmatmul.bf16.gmra.mxu0 %v1765
    %v2004 = vpop.f32.mrf.mxu0
    %v2005 = vadd.f32 0.0, %v2004
    %v2006 = vpop.f32.mrf.mxu0
    %v2007 = vadd.f32 0.0, %v2006
    %2008 = vdwg.mxu0
    %v2009 = vperm.slane %v1954, 0
    %v2010 = vadd.f32 %v1913, %v2009
    %v2011 = vadd.f32 %v1914, %v2009
    %v2012 = vadd.f32 %v1915, %v2009
    %v2013 = vadd.f32 %v1916, %v2009
    %v2014 = vadd.f32 %v1917, %v2009
    %v2015 = vadd.f32 %v1918, %v2009
    %v2016 = vadd.f32 %v1919, %v2009
    %v2017 = vadd.f32 %v1920, %v2009
    %v2018 = vadd.f32 %v1921, %v2009
    %v2019 = vadd.f32 %v1922, %v2009
    %v2020 = vadd.f32 %v1923, %v2009
    %v2021 = vadd.f32 %v1924, %v2009
    %v2022 = vadd.f32 %v1925, %v2009
    %v2023 = vadd.f32 %v1926, %v2009
    %v2024 = vadd.f32 %v1927, %v2009
    %v2025 = vadd.f32 %v1928, %v2009
    %v2026 = vmul.f32 %v1970, 2.0
    %v2027 = vmul.f32 %v1972, 2.0
    %v2028 = vmul.f32 %v1975, 2.0
    %v2029 = vmul.f32 %v1977, 2.0
    %v2030 = vmul.f32 %v1980, 2.0
    %v2031 = vmul.f32 %v1982, 2.0
    %v2032 = vmul.f32 %v1985, 2.0
    %v2033 = vmul.f32 %v1987, 2.0
    %v2034 = vmul.f32 %v1990, 2.0
    %v2035 = vmul.f32 %v1992, 2.0
    %v2036 = vmul.f32 %v1995, 2.0
    %v2037 = vmul.f32 %v1997, 2.0
    %v2038 = vmul.f32 %v2000, 2.0
    %v2039 = vmul.f32 %v2002, 2.0
    %v2040 = vmul.f32 %v2005, 2.0
    %v2041 = vmul.f32 %v2007, 2.0
    %v2042 = vsub.f32 %v2010, %v2026
    %v2043 = vsub.f32 %v2011, %v2027
    %v2044 = vsub.f32 %v2012, %v2028
    %v2045 = vsub.f32 %v2013, %v2029
    %v2046 = vsub.f32 %v2014, %v2030
    %v2047 = vsub.f32 %v2015, %v2031
    %v2048 = vsub.f32 %v2016, %v2032
    %v2049 = vsub.f32 %v2017, %v2033
    %v2050 = vsub.f32 %v2018, %v2034
    %v2051 = vsub.f32 %v2019, %v2035
    %v2052 = vsub.f32 %v2020, %v2036
    %v2053 = vsub.f32 %v2021, %v2037
    %v2054 = vsub.f32 %v2022, %v2038
    %v2055 = vsub.f32 %v2023, %v2039
    %v2056 = vsub.f32 %v2024, %v2040
    %v2057 = vsub.f32 %v2025, %v2041
    %v2058 = vmax.f32 %v2042, 0.0
    %v2059 = vmax.f32 %v2043, 0.0
    %v2060 = vmax.f32 %v2044, 0.0
    %v2061 = vmax.f32 %v2045, 0.0
    %v2062 = vmax.f32 %v2046, 0.0
    %v2063 = vmax.f32 %v2047, 0.0
    %v2064 = vmax.f32 %v2048, 0.0
    %v2065 = vmax.f32 %v2049, 0.0
    %v2066 = vmax.f32 %v2050, 0.0
    %v2067 = vmax.f32 %v2051, 0.0
    %v2068 = vmax.f32 %v2052, 0.0
    %v2069 = vmax.f32 %v2053, 0.0
    %v2070 = vmax.f32 %v2054, 0.0
    %v2071 = vmax.f32 %v2055, 0.0
    %v2072 = vmax.f32 %v2056, 0.0
    %v2073 = vmax.f32 %v2057, 0.0
    %v2074 = vadd.f32 %v2058, 1.0
    %v2075 = vadd.f32 %v2059, 1.0
    %v2076 = vadd.f32 %v2060, 1.0
    %v2077 = vadd.f32 %v2061, 1.0
    %v2078 = vadd.f32 %v2062, 1.0
    %v2079 = vadd.f32 %v2063, 1.0
    %v2080 = vadd.f32 %v2064, 1.0
    %v2081 = vadd.f32 %v2065, 1.0
    %v2082 = vadd.f32 %v2066, 1.0
    %v2083 = vadd.f32 %v2067, 1.0
    %v2084 = vadd.f32 %v2068, 1.0
    %v2085 = vadd.f32 %v2069, 1.0
    %v2086 = vadd.f32 %v2070, 1.0
    %v2087 = vadd.f32 %v2071, 1.0
    %v2088 = vadd.f32 %v2072, 1.0
    %v2089 = vadd.f32 %v2073, 1.0
    %v2090 = vrcp.pop %v2074
    %v2091 = vmul.f32 %v2074, %v2090
    %v2092 = vsub.f32 1.0, %v2091
    %v2093 = vmul.f32 %v2090, %v2092
    %v2094 = vadd.f32 %v2090, %v2093
    %vm2095 = vweird.f32 %v2074
    %vm2096 = vweird.f32 %v2090
    %vm2097 = vmor %vm2095, %vm2096
    %v2098 = vsel %vm2097, %v2090, %v2094
    %v2099 = vand.u32 2147483647, %v2074
    %vm2100 = vcmp.eq.f32.partialorder %v2099, 8.507059e+37
    %v2101 = vand.u32 %v2074, 2147483648
    %v2102 = vor.u32 1.1754944e-38, %v2101
    %v2103 = vsel %vm2100, %v2102, %v2098
    %v2104 = vrcp.pop %v2075
    %v2105 = vmul.f32 %v2075, %v2104
    %v2106 = vsub.f32 1.0, %v2105
    %v2107 = vmul.f32 %v2104, %v2106
    %v2108 = vadd.f32 %v2104, %v2107
    %vm2109 = vweird.f32 %v2075
    %vm2110 = vweird.f32 %v2104
    %vm2111 = vmor %vm2109, %vm2110
    %v2112 = vsel %vm2111, %v2104, %v2108
    %v2113 = vand.u32 2147483647, %v2075
    %vm2114 = vcmp.eq.f32.partialorder %v2113, 8.507059e+37
    %v2115 = vand.u32 %v2075, 2147483648
    %v2116 = vor.u32 1.1754944e-38, %v2115
    %v2117 = vsel %vm2114, %v2116, %v2112
    %v2118 = vrcp.pop %v2076
    %v2119 = vmul.f32 %v2076, %v2118
    %v2120 = vsub.f32 1.0, %v2119
    %v2121 = vmul.f32 %v2118, %v2120
    %v2122 = vadd.f32 %v2118, %v2121
    %vm2123 = vweird.f32 %v2076
    %vm2124 = vweird.f32 %v2118
    %vm2125 = vmor %vm2123, %vm2124
    %v2126 = vsel %vm2125, %v2118, %v2122
    %v2127 = vand.u32 2147483647, %v2076
    %vm2128 = vcmp.eq.f32.partialorder %v2127, 8.507059e+37
    %v2129 = vand.u32 %v2076, 2147483648
    %v2130 = vor.u32 1.1754944e-38, %v2129
    %v2131 = vsel %vm2128, %v2130, %v2126
    %v2132 = vrcp.pop %v2077
    %v2133 = vmul.f32 %v2077, %v2132
    %v2134 = vsub.f32 1.0, %v2133
    %v2135 = vmul.f32 %v2132, %v2134
    %v2136 = vadd.f32 %v2132, %v2135
    %vm2137 = vweird.f32 %v2077
    %vm2138 = vweird.f32 %v2132
    %vm2139 = vmor %vm2137, %vm2138
    %v2140 = vsel %vm2139, %v2132, %v2136
    %v2141 = vand.u32 2147483647, %v2077
    %vm2142 = vcmp.eq.f32.partialorder %v2141, 8.507059e+37
    %v2143 = vand.u32 %v2077, 2147483648
    %v2144 = vor.u32 1.1754944e-38, %v2143
    %v2145 = vsel %vm2142, %v2144, %v2140
    %v2146 = vrcp.pop %v2078
    %v2147 = vmul.f32 %v2078, %v2146
    %v2148 = vsub.f32 1.0, %v2147
    %v2149 = vmul.f32 %v2146, %v2148
    %v2150 = vadd.f32 %v2146, %v2149
    %vm2151 = vweird.f32 %v2078
    %vm2152 = vweird.f32 %v2146
    %vm2153 = vmor %vm2151, %vm2152
    %v2154 = vsel %vm2153, %v2146, %v2150
    %v2155 = vand.u32 2147483647, %v2078
    %vm2156 = vcmp.eq.f32.partialorder %v2155, 8.507059e+37
    %v2157 = vand.u32 %v2078, 2147483648
    %v2158 = vor.u32 1.1754944e-38, %v2157
    %v2159 = vsel %vm2156, %v2158, %v2154
    %v2160 = vrcp.pop %v2079
    %v2161 = vmul.f32 %v2079, %v2160
    %v2162 = vsub.f32 1.0, %v2161
    %v2163 = vmul.f32 %v2160, %v2162
    %v2164 = vadd.f32 %v2160, %v2163
    %vm2165 = vweird.f32 %v2079
    %vm2166 = vweird.f32 %v2160
    %vm2167 = vmor %vm2165, %vm2166
    %v2168 = vsel %vm2167, %v2160, %v2164
    %v2169 = vand.u32 2147483647, %v2079
    %vm2170 = vcmp.eq.f32.partialorder %v2169, 8.507059e+37
    %v2171 = vand.u32 %v2079, 2147483648
    %v2172 = vor.u32 1.1754944e-38, %v2171
    %v2173 = vsel %vm2170, %v2172, %v2168
    %v2174 = vrcp.pop %v2080
    %v2175 = vmul.f32 %v2080, %v2174
    %v2176 = vsub.f32 1.0, %v2175
    %v2177 = vmul.f32 %v2174, %v2176
    %v2178 = vadd.f32 %v2174, %v2177
    %vm2179 = vweird.f32 %v2080
    %vm2180 = vweird.f32 %v2174
    %vm2181 = vmor %vm2179, %vm2180
    %v2182 = vsel %vm2181, %v2174, %v2178
    %v2183 = vand.u32 2147483647, %v2080
    %vm2184 = vcmp.eq.f32.partialorder %v2183, 8.507059e+37
    %v2185 = vand.u32 %v2080, 2147483648
    %v2186 = vor.u32 1.1754944e-38, %v2185
    %v2187 = vsel %vm2184, %v2186, %v2182
    %v2188 = vrcp.pop %v2081
    %v2189 = vmul.f32 %v2081, %v2188
    %v2190 = vsub.f32 1.0, %v2189
    %v2191 = vmul.f32 %v2188, %v2190
    %v2192 = vadd.f32 %v2188, %v2191
    %vm2193 = vweird.f32 %v2081
    %vm2194 = vweird.f32 %v2188
    %vm2195 = vmor %vm2193, %vm2194
    %v2196 = vsel %vm2195, %v2188, %v2192
    %v2197 = vand.u32 2147483647, %v2081
    %vm2198 = vcmp.eq.f32.partialorder %v2197, 8.507059e+37
    %v2199 = vand.u32 %v2081, 2147483648
    %v2200 = vor.u32 1.1754944e-38, %v2199
    %v2201 = vsel %vm2198, %v2200, %v2196
    %v2202 = vrcp.pop %v2082
    %v2203 = vmul.f32 %v2082, %v2202
    %v2204 = vsub.f32 1.0, %v2203
    %v2205 = vmul.f32 %v2202, %v2204
    %v2206 = vadd.f32 %v2202, %v2205
    %vm2207 = vweird.f32 %v2082
    %vm2208 = vweird.f32 %v2202
    %vm2209 = vmor %vm2207, %vm2208
    %v2210 = vsel %vm2209, %v2202, %v2206
    %v2211 = vand.u32 2147483647, %v2082
    %vm2212 = vcmp.eq.f32.partialorder %v2211, 8.507059e+37
    %v2213 = vand.u32 %v2082, 2147483648
    %v2214 = vor.u32 1.1754944e-38, %v2213
    %v2215 = vsel %vm2212, %v2214, %v2210
    %v2216 = vrcp.pop %v2083
    %v2217 = vmul.f32 %v2083, %v2216
    %v2218 = vsub.f32 1.0, %v2217
    %v2219 = vmul.f32 %v2216, %v2218
    %v2220 = vadd.f32 %v2216, %v2219
    %vm2221 = vweird.f32 %v2083
    %vm2222 = vweird.f32 %v2216
    %vm2223 = vmor %vm2221, %vm2222
    %v2224 = vsel %vm2223, %v2216, %v2220
    %v2225 = vand.u32 2147483647, %v2083
    %vm2226 = vcmp.eq.f32.partialorder %v2225, 8.507059e+37
    %v2227 = vand.u32 %v2083, 2147483648
    %v2228 = vor.u32 1.1754944e-38, %v2227
    %v2229 = vsel %vm2226, %v2228, %v2224
    %v2230 = vrcp.pop %v2084
    %v2231 = vmul.f32 %v2084, %v2230
    %v2232 = vsub.f32 1.0, %v2231
    %v2233 = vmul.f32 %v2230, %v2232
    %v2234 = vadd.f32 %v2230, %v2233
    %vm2235 = vweird.f32 %v2084
    %vm2236 = vweird.f32 %v2230
    %vm2237 = vmor %vm2235, %vm2236
    %v2238 = vsel %vm2237, %v2230, %v2234
    %v2239 = vand.u32 2147483647, %v2084
    %vm2240 = vcmp.eq.f32.partialorder %v2239, 8.507059e+37
    %v2241 = vand.u32 %v2084, 2147483648
    %v2242 = vor.u32 1.1754944e-38, %v2241
    %v2243 = vsel %vm2240, %v2242, %v2238
    %v2244 = vrcp.pop %v2085
    %v2245 = vmul.f32 %v2085, %v2244
    %v2246 = vsub.f32 1.0, %v2245
    %v2247 = vmul.f32 %v2244, %v2246
    %v2248 = vadd.f32 %v2244, %v2247
    %vm2249 = vweird.f32 %v2085
    %vm2250 = vweird.f32 %v2244
    %vm2251 = vmor %vm2249, %vm2250
    %v2252 = vsel %vm2251, %v2244, %v2248
    %v2253 = vand.u32 2147483647, %v2085
    %vm2254 = vcmp.eq.f32.partialorder %v2253, 8.507059e+37
    %v2255 = vand.u32 %v2085, 2147483648
    %v2256 = vor.u32 1.1754944e-38, %v2255
    %v2257 = vsel %vm2254, %v2256, %v2252
    %v2258 = vrcp.pop %v2086
    %v2259 = vmul.f32 %v2086, %v2258
    %v2260 = vsub.f32 1.0, %v2259
    %v2261 = vmul.f32 %v2258, %v2260
    %v2262 = vadd.f32 %v2258, %v2261
    %vm2263 = vweird.f32 %v2086
    %vm2264 = vweird.f32 %v2258
    %vm2265 = vmor %vm2263, %vm2264
    %v2266 = vsel %vm2265, %v2258, %v2262
    %v2267 = vand.u32 2147483647, %v2086
    %vm2268 = vcmp.eq.f32.partialorder %v2267, 8.507059e+37
    %v2269 = vand.u32 %v2086, 2147483648
    %v2270 = vor.u32 1.1754944e-38, %v2269
    %v2271 = vsel %vm2268, %v2270, %v2266
    %v2272 = vrcp.pop %v2087
    %v2273 = vmul.f32 %v2087, %v2272
    %v2274 = vsub.f32 1.0, %v2273
    %v2275 = vmul.f32 %v2272, %v2274
    %v2276 = vadd.f32 %v2272, %v2275
    %vm2277 = vweird.f32 %v2087
    %vm2278 = vweird.f32 %v2272
    %vm2279 = vmor %vm2277, %vm2278
    %v2280 = vsel %vm2279, %v2272, %v2276
    %v2281 = vand.u32 2147483647, %v2087
    %vm2282 = vcmp.eq.f32.partialorder %v2281, 8.507059e+37
    %v2283 = vand.u32 %v2087, 2147483648
    %v2284 = vor.u32 1.1754944e-38, %v2283
    %v2285 = vsel %vm2282, %v2284, %v2280
    %v2286 = vrcp.pop %v2088
    %v2287 = vmul.f32 %v2088, %v2286
    %v2288 = vsub.f32 1.0, %v2287
    %v2289 = vmul.f32 %v2286, %v2288
    %v2290 = vadd.f32 %v2286, %v2289
    %vm2291 = vweird.f32 %v2088
    %vm2292 = vweird.f32 %v2286
    %vm2293 = vmor %vm2291, %vm2292
    %v2294 = vsel %vm2293, %v2286, %v2290
    %v2295 = vand.u32 2147483647, %v2088
    %vm2296 = vcmp.eq.f32.partialorder %v2295, 8.507059e+37
    %v2297 = vand.u32 %v2088, 2147483648
    %v2298 = vor.u32 1.1754944e-38, %v2297
    %v2299 = vsel %vm2296, %v2298, %v2294
    %v2300 = vrcp.pop %v2089
    %v2301 = vmul.f32 %v2089, %v2300
    %v2302 = vsub.f32 1.0, %v2301
    %v2303 = vmul.f32 %v2300, %v2302
    %v2304 = vadd.f32 %v2300, %v2303
    %vm2305 = vweird.f32 %v2089
    %vm2306 = vweird.f32 %v2300
    %vm2307 = vmor %vm2305, %vm2306
    %v2308 = vsel %vm2307, %v2300, %v2304
    %v2309 = vand.u32 2147483647, %v2089
    %vm2310 = vcmp.eq.f32.partialorder %v2309, 8.507059e+37
    %v2311 = vand.u32 %v2089, 2147483648
    %v2312 = vor.u32 1.1754944e-38, %v2311
    %v2313 = vsel %vm2310, %v2312, %v2308
    %vm2314 = vcmask 64512
    %v2315 = vsel %vm2314, %v2103, 0.0
    %2316 = vadd.xlane.f32.xlu0 %v2315
    %v2317 = vpop.xlane.xlu0 %2316
    %v2318 = vsel %vm2314, %v2117, 0.0
    %2319 = vadd.xlane.f32.xlu0 %v2318
    %v2320 = vpop.xlane.xlu0 %2319
    %v2321 = vsel %vm2314, %v2131, 0.0
    %2322 = vadd.xlane.f32.xlu0 %v2321
    %v2323 = vpop.xlane.xlu0 %2322
    %v2324 = vsel %vm2314, %v2145, 0.0
    %2325 = vadd.xlane.f32.xlu0 %v2324
    %v2326 = vpop.xlane.xlu0 %2325
    %v2327 = vsel %vm2314, %v2159, 0.0
    %2328 = vadd.xlane.f32.xlu0 %v2327
    %v2329 = vpop.xlane.xlu0 %2328
    %v2330 = vsel %vm2314, %v2173, 0.0
    %2331 = vadd.xlane.f32.xlu0 %v2330
    %v2332 = vpop.xlane.xlu0 %2331
    %v2333 = vsel %vm2314, %v2187, 0.0
    %2334 = vadd.xlane.f32.xlu0 %v2333
    %v2335 = vpop.xlane.xlu0 %2334
    %v2336 = vsel %vm2314, %v2201, 0.0
    %2337 = vadd.xlane.f32.xlu0 %v2336
    %v2338 = vpop.xlane.xlu0 %2337
    %v2339 = vsel %vm2314, %v2215, 0.0
    %2340 = vadd.xlane.f32.xlu0 %v2339
    %v2341 = vpop.xlane.xlu0 %2340
    %v2342 = vsel %vm2314, %v2229, 0.0
    %2343 = vadd.xlane.f32.xlu0 %v2342
    %v2344 = vpop.xlane.xlu0 %2343
    %v2345 = vsel %vm2314, %v2243, 0.0
    %2346 = vadd.xlane.f32.xlu0 %v2345
    %v2347 = vpop.xlane.xlu0 %2346
    %v2348 = vsel %vm2314, %v2257, 0.0
    %2349 = vadd.xlane.f32.xlu0 %v2348
    %v2350 = vpop.xlane.xlu0 %2349
    %v2351 = vsel %vm2314, %v2271, 0.0
    %2352 = vadd.xlane.f32.xlu0 %v2351
    %v2353 = vpop.xlane.xlu0 %2352
    %v2354 = vsel %vm2314, %v2285, 0.0
    %2355 = vadd.xlane.f32.xlu0 %v2354
    %v2356 = vpop.xlane.xlu0 %2355
    %v2357 = vsel %vm2314, %v2299, 0.0
    %2358 = vadd.xlane.f32.xlu0 %v2357
    %v2359 = vpop.xlane.xlu0 %2358
    %v2360 = vsel %vm2314, %v2313, 0.0
    %2361 = vadd.xlane.f32.xlu0 %v2360
    %v2362 = vpop.xlane.xlu0 %2361
    %v2363 = vrcp.pop %v2317
    %v2364 = vmul.f32 %v2317, %v2363
    %v2365 = vsub.f32 1.0, %v2364
    %v2366 = vmul.f32 %v2363, %v2365
    %v2367 = vadd.f32 %v2363, %v2366
    %vm2368 = vweird.f32 %v2317
    %vm2369 = vweird.f32 %v2363
    %vm2370 = vmor %vm2368, %vm2369
    %v2371 = vsel %vm2370, %v2363, %v2367
    %v2372 = vand.u32 2147483647, %v2317
    %vm2373 = vcmp.eq.f32.partialorder %v2372, 8.507059e+37
    %v2374 = vand.u32 %v2317, 2147483648
    %v2375 = vor.u32 1.1754944e-38, %v2374
    %v2376 = vsel %vm2373, %v2375, %v2371
    %v2377 = vrcp.pop %v2320
    %v2378 = vmul.f32 %v2320, %v2377
    %v2379 = vsub.f32 1.0, %v2378
    %v2380 = vmul.f32 %v2377, %v2379
    %v2381 = vadd.f32 %v2377, %v2380
    %vm2382 = vweird.f32 %v2320
    %vm2383 = vweird.f32 %v2377
    %vm2384 = vmor %vm2382, %vm2383
    %v2385 = vsel %vm2384, %v2377, %v2381
    %v2386 = vand.u32 2147483647, %v2320
    %vm2387 = vcmp.eq.f32.partialorder %v2386, 8.507059e+37
    %v2388 = vand.u32 %v2320, 2147483648
    %v2389 = vor.u32 1.1754944e-38, %v2388
    %v2390 = vsel %vm2387, %v2389, %v2385
    %v2391 = vrcp.pop %v2323
    %v2392 = vmul.f32 %v2323, %v2391
    %v2393 = vsub.f32 1.0, %v2392
    %v2394 = vmul.f32 %v2391, %v2393
    %v2395 = vadd.f32 %v2391, %v2394
    %vm2396 = vweird.f32 %v2323
    %vm2397 = vweird.f32 %v2391
    %vm2398 = vmor %vm2396, %vm2397
    %v2399 = vsel %vm2398, %v2391, %v2395
    %v2400 = vand.u32 2147483647, %v2323
    %vm2401 = vcmp.eq.f32.partialorder %v2400, 8.507059e+37
    %v2402 = vand.u32 %v2323, 2147483648
    %v2403 = vor.u32 1.1754944e-38, %v2402
    %v2404 = vsel %vm2401, %v2403, %v2399
    %v2405 = vrcp.pop %v2326
    %v2406 = vmul.f32 %v2326, %v2405
    %v2407 = vsub.f32 1.0, %v2406
    %v2408 = vmul.f32 %v2405, %v2407
    %v2409 = vadd.f32 %v2405, %v2408
    %vm2410 = vweird.f32 %v2326
    %vm2411 = vweird.f32 %v2405
    %vm2412 = vmor %vm2410, %vm2411
    %v2413 = vsel %vm2412, %v2405, %v2409
    %v2414 = vand.u32 2147483647, %v2326
    %vm2415 = vcmp.eq.f32.partialorder %v2414, 8.507059e+37
    %v2416 = vand.u32 %v2326, 2147483648
    %v2417 = vor.u32 1.1754944e-38, %v2416
    %v2418 = vsel %vm2415, %v2417, %v2413
    %v2419 = vrcp.pop %v2329
    %v2420 = vmul.f32 %v2329, %v2419
    %v2421 = vsub.f32 1.0, %v2420
    %v2422 = vmul.f32 %v2419, %v2421
    %v2423 = vadd.f32 %v2419, %v2422
    %vm2424 = vweird.f32 %v2329
    %vm2425 = vweird.f32 %v2419
    %vm2426 = vmor %vm2424, %vm2425
    %v2427 = vsel %vm2426, %v2419, %v2423
    %v2428 = vand.u32 2147483647, %v2329
    %vm2429 = vcmp.eq.f32.partialorder %v2428, 8.507059e+37
    %v2430 = vand.u32 %v2329, 2147483648
    %v2431 = vor.u32 1.1754944e-38, %v2430
    %v2432 = vsel %vm2429, %v2431, %v2427
    %v2433 = vrcp.pop %v2332
    %v2434 = vmul.f32 %v2332, %v2433
    %v2435 = vsub.f32 1.0, %v2434
    %v2436 = vmul.f32 %v2433, %v2435
    %v2437 = vadd.f32 %v2433, %v2436
    %vm2438 = vweird.f32 %v2332
    %vm2439 = vweird.f32 %v2433
    %vm2440 = vmor %vm2438, %vm2439
    %v2441 = vsel %vm2440, %v2433, %v2437
    %v2442 = vand.u32 2147483647, %v2332
    %vm2443 = vcmp.eq.f32.partialorder %v2442, 8.507059e+37
    %v2444 = vand.u32 %v2332, 2147483648
    %v2445 = vor.u32 1.1754944e-38, %v2444
    %v2446 = vsel %vm2443, %v2445, %v2441
    %v2447 = vrcp.pop %v2335
    %v2448 = vmul.f32 %v2335, %v2447
    %v2449 = vsub.f32 1.0, %v2448
    %v2450 = vmul.f32 %v2447, %v2449
    %v2451 = vadd.f32 %v2447, %v2450
    %vm2452 = vweird.f32 %v2335
    %vm2453 = vweird.f32 %v2447
    %vm2454 = vmor %vm2452, %vm2453
    %v2455 = vsel %vm2454, %v2447, %v2451
    %v2456 = vand.u32 2147483647, %v2335
    %vm2457 = vcmp.eq.f32.partialorder %v2456, 8.507059e+37
    %v2458 = vand.u32 %v2335, 2147483648
    %v2459 = vor.u32 1.1754944e-38, %v2458
    %v2460 = vsel %vm2457, %v2459, %v2455
    %v2461 = vrcp.pop %v2338
    %v2462 = vmul.f32 %v2338, %v2461
    %v2463 = vsub.f32 1.0, %v2462
    %v2464 = vmul.f32 %v2461, %v2463
    %v2465 = vadd.f32 %v2461, %v2464
    %vm2466 = vweird.f32 %v2338
    %vm2467 = vweird.f32 %v2461
    %vm2468 = vmor %vm2466, %vm2467
    %v2469 = vsel %vm2468, %v2461, %v2465
    %v2470 = vand.u32 2147483647, %v2338
    %vm2471 = vcmp.eq.f32.partialorder %v2470, 8.507059e+37
    %v2472 = vand.u32 %v2338, 2147483648
    %v2473 = vor.u32 1.1754944e-38, %v2472
    %v2474 = vsel %vm2471, %v2473, %v2469
    %v2475 = vrcp.pop %v2341
    %v2476 = vmul.f32 %v2341, %v2475
    %v2477 = vsub.f32 1.0, %v2476
    %v2478 = vmul.f32 %v2475, %v2477
    %v2479 = vadd.f32 %v2475, %v2478
    %vm2480 = vweird.f32 %v2341
    %vm2481 = vweird.f32 %v2475
    %vm2482 = vmor %vm2480, %vm2481
    %v2483 = vsel %vm2482, %v2475, %v2479
    %v2484 = vand.u32 2147483647, %v2341
    %vm2485 = vcmp.eq.f32.partialorder %v2484, 8.507059e+37
    %v2486 = vand.u32 %v2341, 2147483648
    %v2487 = vor.u32 1.1754944e-38, %v2486
    %v2488 = vsel %vm2485, %v2487, %v2483
    %v2489 = vrcp.pop %v2344
    %v2490 = vmul.f32 %v2344, %v2489
    %v2491 = vsub.f32 1.0, %v2490
    %v2492 = vmul.f32 %v2489, %v2491
    %v2493 = vadd.f32 %v2489, %v2492
    %vm2494 = vweird.f32 %v2344
    %vm2495 = vweird.f32 %v2489
    %vm2496 = vmor %vm2494, %vm2495
    %v2497 = vsel %vm2496, %v2489, %v2493
    %v2498 = vand.u32 2147483647, %v2344
    %vm2499 = vcmp.eq.f32.partialorder %v2498, 8.507059e+37
    %v2500 = vand.u32 %v2344, 2147483648
    %v2501 = vor.u32 1.1754944e-38, %v2500
    %v2502 = vsel %vm2499, %v2501, %v2497
    %v2503 = vrcp.pop %v2347
    %v2504 = vmul.f32 %v2347, %v2503
    %v2505 = vsub.f32 1.0, %v2504
    %v2506 = vmul.f32 %v2503, %v2505
    %v2507 = vadd.f32 %v2503, %v2506
    %vm2508 = vweird.f32 %v2347
    %vm2509 = vweird.f32 %v2503
    %vm2510 = vmor %vm2508, %vm2509
    %v2511 = vsel %vm2510, %v2503, %v2507
    %v2512 = vand.u32 2147483647, %v2347
    %vm2513 = vcmp.eq.f32.partialorder %v2512, 8.507059e+37
    %v2514 = vand.u32 %v2347, 2147483648
    %v2515 = vor.u32 1.1754944e-38, %v2514
    %v2516 = vsel %vm2513, %v2515, %v2511
    %v2517 = vrcp.pop %v2350
    %v2518 = vmul.f32 %v2350, %v2517
    %v2519 = vsub.f32 1.0, %v2518
    %v2520 = vmul.f32 %v2517, %v2519
    %v2521 = vadd.f32 %v2517, %v2520
    %vm2522 = vweird.f32 %v2350
    %vm2523 = vweird.f32 %v2517
    %vm2524 = vmor %vm2522, %vm2523
    %v2525 = vsel %vm2524, %v2517, %v2521
    %v2526 = vand.u32 2147483647, %v2350
    %vm2527 = vcmp.eq.f32.partialorder %v2526, 8.507059e+37
    %v2528 = vand.u32 %v2350, 2147483648
    %v2529 = vor.u32 1.1754944e-38, %v2528
    %v2530 = vsel %vm2527, %v2529, %v2525
    %v2531 = vrcp.pop %v2353
    %v2532 = vmul.f32 %v2353, %v2531
    %v2533 = vsub.f32 1.0, %v2532
    %v2534 = vmul.f32 %v2531, %v2533
    %v2535 = vadd.f32 %v2531, %v2534
    %vm2536 = vweird.f32 %v2353
    %vm2537 = vweird.f32 %v2531
    %vm2538 = vmor %vm2536, %vm2537
    %v2539 = vsel %vm2538, %v2531, %v2535
    %v2540 = vand.u32 2147483647, %v2353
    %vm2541 = vcmp.eq.f32.partialorder %v2540, 8.507059e+37
    %v2542 = vand.u32 %v2353, 2147483648
    %v2543 = vor.u32 1.1754944e-38, %v2542
    %v2544 = vsel %vm2541, %v2543, %v2539
    %v2545 = vrcp.pop %v2356
    %v2546 = vmul.f32 %v2356, %v2545
    %v2547 = vsub.f32 1.0, %v2546
    %v2548 = vmul.f32 %v2545, %v2547
    %v2549 = vadd.f32 %v2545, %v2548
    %vm2550 = vweird.f32 %v2356
    %vm2551 = vweird.f32 %v2545
    %vm2552 = vmor %vm2550, %vm2551
    %v2553 = vsel %vm2552, %v2545, %v2549
    %v2554 = vand.u32 2147483647, %v2356
    %vm2555 = vcmp.eq.f32.partialorder %v2554, 8.507059e+37
    %v2556 = vand.u32 %v2356, 2147483648
    %v2557 = vor.u32 1.1754944e-38, %v2556
    %v2558 = vsel %vm2555, %v2557, %v2553
    %v2559 = vrcp.pop %v2359
    %v2560 = vmul.f32 %v2359, %v2559
    %v2561 = vsub.f32 1.0, %v2560
    %v2562 = vmul.f32 %v2559, %v2561
    %v2563 = vadd.f32 %v2559, %v2562
    %vm2564 = vweird.f32 %v2359
    %vm2565 = vweird.f32 %v2559
    %vm2566 = vmor %vm2564, %vm2565
    %v2567 = vsel %vm2566, %v2559, %v2563
    %v2568 = vand.u32 2147483647, %v2359
    %vm2569 = vcmp.eq.f32.partialorder %v2568, 8.507059e+37
    %v2570 = vand.u32 %v2359, 2147483648
    %v2571 = vor.u32 1.1754944e-38, %v2570
    %v2572 = vsel %vm2569, %v2571, %v2567
    %v2573 = vrcp.pop %v2362
    %v2574 = vmul.f32 %v2362, %v2573
    %v2575 = vsub.f32 1.0, %v2574
    %v2576 = vmul.f32 %v2573, %v2575
    %v2577 = vadd.f32 %v2573, %v2576
    %vm2578 = vweird.f32 %v2362
    %vm2579 = vweird.f32 %v2573
    %vm2580 = vmor %vm2578, %vm2579
    %v2581 = vsel %vm2580, %v2573, %v2577
    %v2582 = vand.u32 2147483647, %v2362
    %vm2583 = vcmp.eq.f32.partialorder %v2582, 8.507059e+37
    %v2584 = vand.u32 %v2362, 2147483648
    %v2585 = vor.u32 1.1754944e-38, %v2584
    %v2586 = vsel %vm2583, %v2585, %v2581
    %v2587 = vmul.f32 %v2103, %v2376
    %v2588 = vmul.f32 %v2117, %v2390
    %v2589 = vmul.f32 %v2131, %v2404
    %v2590 = vmul.f32 %v2145, %v2418
    %v2591 = vmul.f32 %v2159, %v2432
    %v2592 = vmul.f32 %v2173, %v2446
    %v2593 = vmul.f32 %v2187, %v2460
    %v2594 = vmul.f32 %v2201, %v2474
    %v2595 = vmul.f32 %v2215, %v2488
    %v2596 = vmul.f32 %v2229, %v2502
    %v2597 = vmul.f32 %v2243, %v2516
    %v2598 = vmul.f32 %v2257, %v2530
    %v2599 = vmul.f32 %v2271, %v2544
    %v2600 = vmul.f32 %v2285, %v2558
    %v2601 = vmul.f32 %v2299, %v2572
    %v2602 = vmul.f32 %v2313, %v2586
    %2603 = vst [vmem:[#allocation4] sm:$0xff] 0.0
    %2604 = vst [vmem:[#allocation4 + $0x8] sm:$0xff] 0.0
    %2605 = vst [vmem:[#allocation4 + $0x10] sm:$0xff] 0.0
    %2606 = vst [vmem:[#allocation4 + $0x18] sm:$0xff] 0.0
    %2607 = vst [vmem:[#allocation4 + $0x20] sm:$0xff] 0.0
    %2608 = vst [vmem:[#allocation4 + $0x28] sm:$0xff] 0.0
    %2609 = vst [vmem:[#allocation4 + $0x30] sm:$0xff] 0.0
    %2610 = vst [vmem:[#allocation4 + $0x38] sm:$0xff] 0.0
    %2611 = vst [vmem:[#allocation4 + $0x40] sm:$0xff] 0.0
    %2612 = vst [vmem:[#allocation4 + $0x48] sm:$0xff] 0.0
    %2613 = vst [vmem:[#allocation4 + $0x50] sm:$0xff] 0.0
    %2614 = vst [vmem:[#allocation4 + $0x58] sm:$0xff] 0.0
    %2615 = vst [vmem:[#allocation4 + $0x60] sm:$0xff] 0.0
    %2616 = vst [vmem:[#allocation4 + $0x68] sm:$0xff] 0.0
    %2617 = vst [vmem:[#allocation4 + $0x70] sm:$0xff] 0.0
    %2618 = vst [vmem:[#allocation4 + $0x78] sm:$0xff] 0.0
    %2619 = vst.msk [vmem:[#allocation4] sm:$0xff] %vm941, %v1719
    %2620 = vst.msk [vmem:[#allocation4 + $0x8] sm:$0xff] %vm941, %v1720
    %2621 = vst.msk [vmem:[#allocation4 + $0x10] sm:$0xff] %vm941, %v1721
    %2622 = vst.msk [vmem:[#allocation4 + $0x18] sm:$0xff] %vm941, %v1722
    %2623 = vst.msk [vmem:[#allocation4 + $0x20] sm:$0xff] %vm941, %v1723
    %2624 = vst.msk [vmem:[#allocation4 + $0x28] sm:$0xff] %vm941, %v1724
    %2625 = vst.msk [vmem:[#allocation4 + $0x30] sm:$0xff] %vm941, %v1725
    %2626 = vst.msk [vmem:[#allocation4 + $0x38] sm:$0xff] %vm941, %v1726
    %2627 = vst.msk [vmem:[#allocation4 + $0x40] sm:$0xff] %vm941, %v1727
    %2628 = vst.msk [vmem:[#allocation4 + $0x48] sm:$0xff] %vm941, %v1728
    %2629 = vst.msk [vmem:[#allocation4 + $0x50] sm:$0xff] %vm941, %v1729
    %2630 = vst.msk [vmem:[#allocation4 + $0x58] sm:$0xff] %vm941, %v1730
    %2631 = vst.msk [vmem:[#allocation4 + $0x60] sm:$0xff] %vm941, %v1731
    %2632 = vst.msk [vmem:[#allocation4 + $0x68] sm:$0xff] %vm941, %v1732
    %2633 = vst.msk [vmem:[#allocation4 + $0x70] sm:$0xff] %vm941, %v1733
    %2634 = vst.msk [vmem:[#allocation4 + $0x78] sm:$0xff] %vm941, %v1734
    %2651 = vrot.lane.b32.xlu0 %v2587, 16
    %v2652 = vpop.permute.xlu0 %2651
    %2653 = vrot.lane.b32.xlu0 %v2588, 16
    %v2654 = vpop.permute.xlu0 %2653
    %2655 = vrot.lane.b32.xlu0 %v2589, 16
    %v2656 = vpop.permute.xlu0 %2655
    %2657 = vrot.lane.b32.xlu0 %v2590, 16
    %v2658 = vpop.permute.xlu0 %2657
    %2659 = vrot.lane.b32.xlu0 %v2591, 16
    %v2660 = vpop.permute.xlu0 %2659
    %2661 = vrot.lane.b32.xlu0 %v2592, 16
    %v2662 = vpop.permute.xlu0 %2661
    %2663 = vrot.lane.b32.xlu0 %v2593, 16
    %v2664 = vpop.permute.xlu0 %2663
    %2665 = vrot.lane.b32.xlu0 %v2594, 16
    %v2666 = vpop.permute.xlu0 %2665
    %2667 = vrot.lane.b32.xlu0 %v2595, 16
    %v2668 = vpop.permute.xlu0 %2667
    %2669 = vrot.lane.b32.xlu0 %v2596, 16
    %v2670 = vpop.permute.xlu0 %2669
    %2671 = vrot.lane.b32.xlu0 %v2597, 16
    %v2672 = vpop.permute.xlu0 %2671
    %2673 = vrot.lane.b32.xlu0 %v2598, 16
    %v2674 = vpop.permute.xlu0 %2673
    %2675 = vrot.lane.b32.xlu0 %v2599, 16
    %v2676 = vpop.permute.xlu0 %2675
    %2677 = vrot.lane.b32.xlu0 %v2600, 16
    %v2678 = vpop.permute.xlu0 %2677
    %2679 = vrot.lane.b32.xlu0 %v2601, 16
    %v2680 = vpop.permute.xlu0 %2679
    %2681 = vrot.lane.b32.xlu0 %v2602, 16
    %v2682 = vpop.permute.xlu0 %2681
    %vm2699 = vcmask 195712
    %2700 = vst.msk [vmem:[#allocation4] sm:$0xff] %vm2699, %v2652
    %2701 = vst.msk [vmem:[#allocation4 + $0x8] sm:$0xff] %vm2699, %v2654
    %2702 = vst.msk [vmem:[#allocation4 + $0x10] sm:$0xff] %vm2699, %v2656
    %2703 = vst.msk [vmem:[#allocation4 + $0x18] sm:$0xff] %vm2699, %v2658
    %2704 = vst.msk [vmem:[#allocation4 + $0x20] sm:$0xff] %vm2699, %v2660
    %2705 = vst.msk [vmem:[#allocation4 + $0x28] sm:$0xff] %vm2699, %v2662
    %2706 = vst.msk [vmem:[#allocation4 + $0x30] sm:$0xff] %vm2699, %v2664
    %2707 = vst.msk [vmem:[#allocation4 + $0x38] sm:$0xff] %vm2699, %v2666
    %2708 = vst.msk [vmem:[#allocation4 + $0x40] sm:$0xff] %vm2699, %v2668
    %2709 = vst.msk [vmem:[#allocation4 + $0x48] sm:$0xff] %vm2699, %v2670
    %2710 = vst.msk [vmem:[#allocation4 + $0x50] sm:$0xff] %vm2699, %v2672
    %2711 = vst.msk [vmem:[#allocation4 + $0x58] sm:$0xff] %vm2699, %v2674
    %2712 = vst.msk [vmem:[#allocation4 + $0x60] sm:$0xff] %vm2699, %v2676
    %2713 = vst.msk [vmem:[#allocation4 + $0x68] sm:$0xff] %vm2699, %v2678
    %2714 = vst.msk [vmem:[#allocation4 + $0x70] sm:$0xff] %vm2699, %v2680
    %2715 = vst.msk [vmem:[#allocation4 + $0x78] sm:$0xff] %vm2699, %v2682
    // Predicated region
    $region30: #{tpu_custom_call.1} parent=1 // pred_check
      _
    $region31: #{tpu_custom_call.1} parent=1 // pred_check_branch
      %2717 = sbr.rel (0) target = $region33
    $region32: #{tpu_custom_call.1} parent=1 // pred_region
      %2719 = vsyncadd [#allocation3], 0
      %s2720 = sshll.u32 [#allocation2], 4
      %s2721 = int_to_ptr.vmem [resolvable:$true] %s2720
      %s2722 = sshll.u32 %s7, 4
      %s2723 = int_to_ptr.hbm [resolvable:$true] %s2722
      %2728 = dma.vmem_to_hbm [thread:$0]  %s2721, 2048, %s2723, [#allocation3], 128, 128, 8
    $region33: #{tpu_custom_call.1} parent=1 // pred_fallthru
      _
    // Predicated region
    $region34: #{tpu_custom_call.1} parent=1 // pred_check
      _
    $region35: #{tpu_custom_call.1} parent=1 // pred_check_branch
      %2730 = sbr.rel (0) target = $region37
    $region36: #{tpu_custom_call.1} parent=1 // pred_region
      %2732 = vsyncadd [#allocation5], 0
      %s2733 = sshll.u32 [#allocation4], 4
      %s2734 = int_to_ptr.vmem [resolvable:$true] %s2733
      %s2735 = sshll.u32 %s8, 4
      %s2736 = int_to_ptr.hbm [resolvable:$true] %s2735
      %2741 = dma.vmem_to_hbm [thread:$0]  %s2734, 2048, %s2736, [#allocation5], 128, 128, 8
    $region37: #{tpu_custom_call.1} parent=1 // pred_fallthru
      _
    // Predicated region
    $region38: #{tpu_custom_call.1} parent=1 // pred_check
      _
    $region39: #{tpu_custom_call.1} parent=1 // pred_check_branch
      %2743 = sbr.rel (0) target = $region41
    $region40: #{tpu_custom_call.1} parent=1 // pred_region
      %2745 = dma.done [#allocation3], 2048
    $region41: #{tpu_custom_call.1} parent=1 // pred_fallthru
      _
    // Predicated region
    $region42: #{tpu_custom_call.1} parent=1 // pred_check
      _
    $region43: #{tpu_custom_call.1} parent=1 // pred_check_branch
      %2747 = sbr.rel (0) target = $region45
    $region44: #{tpu_custom_call.1} parent=1 // pred_region
      %2749 = dma.done [#allocation5], 2048
    $region45: #{tpu_custom_call.1} parent=1 // pred_fallthru
      _
    %2750 = vsyncpa [#allocation3], 1
    %2751 = vsyncpa [#allocation5], 1

</llo_original>
